<compile_context>
chip_gen: v7x
topology: tpu7x:2x2x1
jax: 0.10.0
libtpu: 0.0.40
codegen_flags: <defaults>
</compile_context>

<pallas_src>
import math
from functools import partial

import jax
import jax.numpy as jnp
from jax import lax
from jax.experimental import pallas as pl
from jax.experimental.pallas import tpu as pltpu


# ----------------------------------------------------------------------------
# Helpers
# ----------------------------------------------------------------------------

def _full_spec(a):
    """BlockSpec covering the whole array (grid=(1,))."""
    zeros = (0,) * a.ndim
    return pl.BlockSpec(a.shape, lambda *_: zeros)


# ----------------------------------------------------------------------------
# Pallas kernels
# ----------------------------------------------------------------------------

def patch_embed_kernel(x_ref, w_ref, b_ref, o_ref):
    """Linear patch embedding on batch-folded rows: (B*L, P) @ (P, D) + b."""
    x = x_ref[...].astype(jnp.bfloat16)
    o_ref[...] = (
        jnp.dot(x, w_ref[...], preferred_element_type=jnp.float32) + b_ref[...]
    )


def fused_cnn_kernel(x_ref, *refs, dilations, ksize, seq_len, neg_slope):
    """Entire CausalCNN encoder in one kernel.

    refs layout: for each block (w1, b1, w2, b2, wr, br), then pool_w, pool_b,
    then the output ref.  Activations stay batch-folded as (B*T, C); the
    causal shift along T uses pltpu.roll on the sublane axis plus a row mask
    (rows with t < shift are zeroed, which also kills cross-batch wraparound).
    """
    o_ref = refs[-1]
    pool_w_ref = refs[-3]
    pool_b_ref = refs[-2]
    block_refs = refs[:-3]

    x = x_ref[...]                                        # (B*T, C_in) f32
    bt = x.shape[0]
    nb = bt // seq_len                                    # batch count (static)
    t_idx = lax.broadcasted_iota(jnp.int32, (bt, 1), 0) % seq_len

    def causal_shift(v, s):
        if s == 0:
            return v
        if s >= seq_len:                                  # fully masked tap
            return jnp.zeros_like(v)
        rolled = pltpu.roll(v, shift=s, axis=0)           # XLU sublane rotate
        return jnp.where(t_idx >= s, rolled, jnp.zeros_like(rolled))

    def causal_conv(v, w_ref, b_ref, dilation):
        # y[t] = sum_k x[t - d*(ksize-1-k)] @ W[k] + b  as ONE matmul with a
        # (rows, ksize*C_in) shifted-and-stacked input (better MXU occupancy
        # than 3 skinny matmuls).
        taps = [causal_shift(v, dilation * (ksize - 1 - k)) for k in range(ksize)]
        stacked = jnp.concatenate(taps, axis=-1).astype(jnp.bfloat16)
        return (jnp.dot(stacked, w_ref[...], preferred_element_type=jnp.float32)
                + b_ref[...])

    def lrelu(v):
        return jnp.where(v > 0, v, neg_slope * v)

    for i, dil in enumerate(dilations):
        w1, b1, w2, b2, wr, br = block_refs[i * 6:(i + 1) * 6]
        h = lrelu(causal_conv(x, w1, b1, dil))
        h = lrelu(causal_conv(h, w2, b2, dil))
        res = (jnp.dot(x.astype(jnp.bfloat16), wr[...],
                       preferred_element_type=jnp.float32) + br[...])
        x = h + res

    # AdaptiveMaxPool1d(1) over time per sequence + Linear(reduced -> out).
    pooled = jnp.concatenate(
        [jnp.max(x[b * seq_len:(b + 1) * seq_len, :], axis=0, keepdims=True)
         for b in range(nb)], axis=0)                     # (B, reduced_size)
    o_ref[...] = (jnp.dot(pooled.astype(jnp.bfloat16), pool_w_ref[...],
                          preferred_element_type=jnp.float32) + pool_b_ref[...])


def fusion_head_kernel(ts_ref, tok_ref, lnw_ref, lnb_ref,
                       wq_ref, bq_ref, wk_ref, bk_ref, wv_ref, bv_ref,
                       wvs_ref, bvs_ref, wos_ref, bos_ref,
                       wp1_ref, bp1_ref, wp2_ref, bp2_ref, o_ref, *, lk):
    """Fused: MAE final LayerNorm + CrossAttentionBlock + last self-attn
    (seq_len==1 MultiheadAttention) + projection head (Linear-ReLU-Linear).

    All batch rows are processed in one step; cross attention over the folded
    (B*Lk, d) keys/values is made block-diagonal with a -inf column mask."""
    tokens = tok_ref[...]                                 # (B*Lk, 768) f32
    q_in = ts_ref[...]                                    # (B, d_v)   f32
    d_k = wq_ref.shape[1]

    # MAE encoder final LayerNorm (eps=1e-6), rowwise.
    mu = jnp.mean(tokens, axis=-1, keepdims=True)
    var = jnp.mean((tokens - mu) ** 2, axis=-1, keepdims=True)
    tokens = (tokens - mu) * lax.rsqrt(var + 1e-6) * lnw_ref[...] + lnb_ref[...]
    tokens_bf = tokens.astype(jnp.bfloat16)

    # Cross attention: Q from the time-series feature, K/V from MAE tokens.
    q = jnp.dot(q_in.astype(jnp.bfloat16), wq_ref[...],
                preferred_element_type=jnp.float32) + bq_ref[...]
    k = jnp.dot(tokens_bf, wk_ref[...],
                preferred_element_type=jnp.float32) + bk_ref[...]
    v = jnp.dot(tokens_bf, wv_ref[...],
                preferred_element_type=jnp.float32) + bv_ref[...]

    scores = lax.dot_general(q.astype(jnp.bfloat16), k.astype(jnp.bfloat16),
                             (((1,), (1,)), ((), ())),
                             preferred_element_type=jnp.float32)   # (B, B*Lk)
    scores = scores * (1.0 / math.sqrt(d_k))
    row_b = lax.broadcasted_iota(jnp.int32, scores.shape, 0)
    col_b = lax.broadcasted_iota(jnp.int32, scores.shape, 1) // lk
    scores = jnp.where(row_b == col_b, scores, -1e30)     # block-diagonal mask
    scores = scores - jnp.max(scores, axis=-1, keepdims=True)
    p = jnp.exp(scores)
    attn = p * pl.reciprocal(jnp.sum(p, axis=-1, keepdims=True), approx=True)
    x = jnp.dot(attn.astype(jnp.bfloat16), v.astype(jnp.bfloat16),
                preferred_element_type=jnp.float32)       # (B, d_v)

    # Last nn.MultiheadAttention with sequence length 1: softmax over a single
    # key is identically 1, so per-head output == v_head; concatenating heads
    # gives the full v-projection -> out_proj(v_proj(x)).
    v_sa = jnp.dot(x.astype(jnp.bfloat16), wvs_ref[...],
                   preferred_element_type=jnp.float32) + bvs_ref[...]
    x = jnp.dot(v_sa.astype(jnp.bfloat16), wos_ref[...],
                preferred_element_type=jnp.float32) + bos_ref[...]

    # Projection head: Linear -> ReLU -> Linear.
    h = jnp.dot(x.astype(jnp.bfloat16), wp1_ref[...],
                preferred_element_type=jnp.float32) + bp1_ref[...]
    h = jnp.maximum(h, 0.0)
    o_ref[...] = jnp.dot(h.astype(jnp.bfloat16), wp2_ref[...],
                         preferred_element_type=jnp.float32) + bp2_ref[...]


# ----------------------------------------------------------------------------
# pallas_call wrappers
# ----------------------------------------------------------------------------

def patch_embed(x2d, w_bf16, b):
    M, _ = x2d.shape
    D = w_bf16.shape[1]
    return pl.pallas_call(
        patch_embed_kernel,
        out_shape=jax.ShapeDtypeStruct((M, D), jnp.float32),
        grid=(1,),
        in_specs=[_full_spec(x2d), _full_spec(w_bf16), _full_spec(b)],
        out_specs=pl.BlockSpec((M, D), lambda i: (0, 0)),
        compiler_params=pltpu.CompilerParams(dimension_semantics=("arbitrary",)),
    )(x2d, w_bf16, b)


def causal_cnn_encoder_apply(time_series, cp, *, ksize=3):
    """CausalCNNEncoder stand-in: dilated causal conv blocks + max-pool + linear,
    all in a single fused Pallas kernel (activations stay in VMEM)."""
    B, c_in, T = time_series.shape
    x2d = jnp.transpose(time_series, (0, 2, 1)).reshape(B * T, c_in)

    flat, dils = [], []
    for blk in cp["blocks"]:
        ks, ci, co = blk["w1"].shape
        flat += [blk["w1"].reshape(ks * ci, co).astype(jnp.bfloat16), blk["b1"],
                 blk["w2"].reshape(ks * co, co).astype(jnp.bfloat16), blk["b2"],
                 blk["wr"].astype(jnp.bfloat16), blk["br"]]
        dils.append(blk["dilation"])
    flat += [cp["pool_w"].astype(jnp.bfloat16), cp["pool_b"]]
    out_ch = cp["pool_w"].shape[1]

    in_arrays = [x2d] + flat
    kern = partial(fused_cnn_kernel, dilations=tuple(dils), ksize=ksize,
                   seq_len=T, neg_slope=0.01)
    # TODO(synk): original CausalCNNEncoder source (depth=10 + weight_norm) is
    # not provided; this demo uses 4 dilated residual blocks (dilations
    # 1,2,4,8) with weight_norm folded into effective weights.
    return pl.pallas_call(
        kern,
        out_shape=jax.ShapeDtypeStruct((B, out_ch), jnp.float32),
        grid=(1,),
        in_specs=[_full_spec(a) for a in in_arrays],
        out_specs=pl.BlockSpec((B, out_ch), lambda i: (0, 0)),
        compiler_params=pltpu.CompilerParams(dimension_semantics=("arbitrary",)),
    )(*in_arrays)


_HEAD_WEIGHT_NAMES = ("ln_w", "ln_b", "wq", "bq", "wk", "bk", "wv", "bv",
                      "wv_sa", "bv_sa", "wo_sa", "bo_sa",
                      "wp1", "bp1", "wp2", "bp2")
_HEAD_BF16 = {"wq", "wk", "wv", "wv_sa", "wo_sa", "wp1", "wp2"}


def fusion_head(ts_feat, mae_tokens, hp):
    B, Lk, D = mae_tokens.shape
    tokens2d = mae_tokens.reshape(B * Lk, D)
    pdim = hp["wp2"].shape[1]

    weights = [hp[n].astype(jnp.bfloat16) if n in _HEAD_BF16 else hp[n]
               for n in _HEAD_WEIGHT_NAMES]
    in_arrays = [ts_feat, tokens2d] + weights

    return pl.pallas_call(
        partial(fusion_head_kernel, lk=Lk),
        out_shape=jax.ShapeDtypeStruct((B, pdim), jnp.float32),
        grid=(1,),
        in_specs=[_full_spec(a) for a in in_arrays],
        out_specs=pl.BlockSpec((B, pdim), lambda i: (0, 0)),
        compiler_params=pltpu.CompilerParams(dimension_semantics=("arbitrary",)),
    )(*in_arrays)


# ----------------------------------------------------------------------------
# Model "modules" (glue in plain JAX, hot paths in the Pallas kernels above)
# ----------------------------------------------------------------------------

def mae_encoder_apply(image, mp, mask_key, mask_ratio=0.75, patch=16):
    """MAEViTEncoder stand-in: patchify -> patch-embed (Pallas, batch-folded)
    -> +pos-embed -> random 75% masking -> prepend cls token.  The final
    LayerNorm(eps=1e-6) is fused into the fusion_head Pallas kernel."""
    B, C, H, W = image.shape
    hp_, wp_ = H // patch, W // patch
    L = hp_ * wp_
    # patchify, channel-last inside each patch (matches MAE ordering).
    x = image.reshape(B, C, hp_, patch, wp_, patch)
    x = jnp.transpose(x, (0, 2, 4, 3, 5, 1)).reshape(B * L, patch * patch * C)

    tokens = patch_embed(x, mp["w_embed"].astype(jnp.bfloat16), mp["b_embed"])
    tokens = tokens.reshape(B, L, -1) + mp["pos_embed"][:, 1:, :]

    # Random masking: keep (1 - mask_ratio) of the patches, per sample.
    len_keep = int(L * (1 - mask_ratio))
    noise = jax.random.uniform(mask_key, (B, L))
    ids_keep = jnp.argsort(noise, axis=1)[:, :len_keep]
    tokens = jnp.take_along_axis(tokens, ids_keep[:, :, None], axis=1)

    cls = mp["cls_token"] + mp["pos_embed"][:, :1, :]
    cls = jnp.broadcast_to(cls, (B, 1, tokens.shape[2]))
    tokens = jnp.concatenate([cls, tokens], axis=1)       # (B, 1+keep, 768)
    # TODO(synk): MAEViTEncoder's 12 frozen transformer blocks are not part of
    # the provided module source; they are omitted from this synthetic stand-in.
    return tokens


def fusion_model_forward(image, time_series, params, mask_key):
    mae_tokens = mae_encoder_apply(image, params["mae"], mask_key)   # (B, Lk, 768)
    ts_feat = causal_cnn_encoder_apply(time_series, params["cnn"])   # (B, 160)
    # NOTE: the original forward loops over 7 self-attn layers but feeds each
    # the same input and only keeps the last output, so only the final layer
    # contributes; it is fused into the fusion_head kernel.  The original
    # unsqueeze(1)/squeeze(1) pair collapses away in the fused head.
    return fusion_head(ts_feat, mae_tokens, params["head"])          # (B, 64)


# ----------------------------------------------------------------------------
# Deterministic parameter construction
# ----------------------------------------------------------------------------

def make_params(key, *, d_k=160, d_v=160, d_embed=768, projection_dim=64,
                in_channels=18, channels=40, reduced_size=320,
                out_channels=160, num_patches=16, patch=16, img_channels=3):
    keys = iter(jax.random.split(key, 64))

    def nrm(shape, scale=0.02):
        return (scale * jax.random.normal(next(keys), shape)).astype(jnp.float32)

    patch_dim = patch * patch * img_channels
    mae = dict(
        w_embed=nrm((patch_dim, d_embed)),
        b_embed=nrm((1, d_embed)),
        pos_embed=nrm((1, num_patches + 1, d_embed)),
        cls_token=nrm((1, 1, d_embed)),
    )

    block_cfg = [(in_channels, channels, 1), (channels, channels, 2),
                 (channels, channels, 4), (channels, reduced_size, 8)]
    blocks = []
    for c_in, c_out, dil in block_cfg:
        blocks.append(dict(
            w1=nrm((3, c_in, c_out)), b1=nrm((1, c_out)),
            w2=nrm((3, c_out, c_out)), b2=nrm((1, c_out)),
            wr=nrm((c_in, c_out)), br=nrm((1, c_out)),
            dilation=dil))
    cnn = dict(blocks=blocks,
               pool_w=nrm((reduced_size, out_channels)),
               pool_b=nrm((1, out_channels)))

    head = dict(
        ln_w=jnp.ones((1, d_embed), jnp.float32),
        ln_b=jnp.zeros((1, d_embed), jnp.float32),
        wq=nrm((d_v, d_k)), bq=nrm((1, d_k)),
        wk=nrm((d_embed, d_k)), bk=nrm((1, d_k)),
        wv=nrm((d_embed, d_v)), bv=nrm((1, d_v)),
        wv_sa=nrm((d_v, d_v)), bv_sa=nrm((1, d_v)),
        wo_sa=nrm((d_v, d_v)), bo_sa=nrm((1, d_v)),
        wp1=nrm((d_v, projection_dim)), bp1=nrm((1, projection_dim)),
        wp2=nrm((projection_dim, projection_dim)), bp2=nrm((1, projection_dim)),
    )
    return dict(mae=mae, cnn=cnn, head=head)


# ----------------------------------------------------------------------------
# Demo
# ----------------------------------------------------------------------------

if __name__ == "__main__":
    key = jax.random.PRNGKey(0)
    k_img, k_ts, k_params, k_mask = jax.random.split(key, 4)

    B = 2
    image = jax.random.normal(k_img, (B, 3, 64, 64), dtype=jnp.float32)       # NCHW
    time_series = jax.random.normal(k_ts, (B, 18, 64), dtype=jnp.float32)     # (B, C, T)

    params = make_params(k_params)

    out = fusion_model_forward(image, time_series, params, k_mask)
    out = jax.block_until_ready(out)
    assert out.shape == (B, 64), out.shape
    assert bool(jnp.all(jnp.isfinite(out)))
    print("KERNEL_OK")
</pallas_src>

<mosaic_0001>
module attributes {stable_mosaic.version = 11 : i64} {
  func.func @patch_embed_kernel(%arg0: i32, %arg1: memref<32x768xf32, #tpu.memory_space<vmem>>, %arg2: memref<768x768xbf16, #tpu.memory_space<vmem>>, %arg3: memref<1x768xf32, #tpu.memory_space<vmem>>, %arg4: memref<32x768xf32, #tpu.memory_space<vmem>>) attributes {dimension_semantics = [#tpu.dimension_semantics<arbitrary>], iteration_bounds = array<i64: 1>, scalar_prefetch = 0 : i64, scratch_operands = 0 : i64, tpu.core_type = #tpu.core_type<tc>, window_params = [{pipeline_mode = #tpu.pipeline_mode<synchronous>, transform_indices = @transform_0, window_bounds = array<i64: 32, 768>}, {pipeline_mode = #tpu.pipeline_mode<synchronous>, transform_indices = @transform_1, window_bounds = array<i64: 768, 768>}, {pipeline_mode = #tpu.pipeline_mode<synchronous>, transform_indices = @transform_2, window_bounds = array<i64: 1, 768>}, {pipeline_mode = #tpu.pipeline_mode<synchronous>, transform_indices = @transform_3, window_bounds = array<i64: 32, 768>}]} {
    %c0 = arith.constant 0 : index
    %c0_0 = arith.constant 0 : index
    %0 = vector.load %arg1[%c0, %c0_0] : memref<32x768xf32, #tpu.memory_space<vmem>>, vector<32x768xf32>
    %1 = arith.truncf %0 : vector<32x768xf32> to vector<32x768xbf16>
    %c0_1 = arith.constant 0 : index
    %c0_2 = arith.constant 0 : index
    %2 = vector.load %arg2[%c0_1, %c0_2] : memref<768x768xbf16, #tpu.memory_space<vmem>>, vector<768x768xbf16>
    %cst = arith.constant dense<0.000000e+00> : vector<32x768xf32>
    %3 = tpu.matmul %1, %2, %cst {dimension_numbers = #tpu.dot_dimension_numbers<[1], [0], [0], [1], [0, 0, 1, 1], [], []>} : vector<32x768xbf16>, vector<768x768xbf16>, vector<32x768xf32> -> vector<32x768xf32>
    %c0_3 = arith.constant 0 : index
    %c0_4 = arith.constant 0 : index
    %4 = vector.load %arg3[%c0_3, %c0_4] : memref<1x768xf32, #tpu.memory_space<vmem>>, vector<1x768xf32>
    %5 = vector.broadcast %4 : vector<1x768xf32> to vector<32x768xf32>
    %6 = arith.addf %3, %5 : vector<32x768xf32>
    %c0_5 = arith.constant 0 : index
    %c0_6 = arith.constant 0 : index
    %7 = vector.load %arg4[%c0_5, %c0_6] : memref<32x768xf32, #tpu.memory_space<vmem>>, vector<32x768xf32>
    tpu.vector_store %arg4[%c0_5, %c0_6], %6 {strides = array<i32>} : memref<32x768xf32, #tpu.memory_space<vmem>>, vector<32x768xf32>,
    return
  }
  func.func @transform_0(%arg0: i32) -> (i32, i32) {
    %c0_i32 = arith.constant 0 : i32
    %c0_i32_0 = arith.constant 0 : i32
    %c0_i32_1 = arith.constant 0 : i32
    return %c0_i32, %c0_i32_0 : i32, i32
  }
  func.func @transform_1(%arg0: i32) -> (i32, i32) {
    %c0_i32 = arith.constant 0 : i32
    %c0_i32_0 = arith.constant 0 : i32
    %c0_i32_1 = arith.constant 0 : i32
    return %c0_i32, %c0_i32_0 : i32, i32
  }
  func.func @transform_2(%arg0: i32) -> (i32, i32) {
    %c0_i32 = arith.constant 0 : i32
    %c0_i32_0 = arith.constant 0 : i32
    %c0_i32_1 = arith.constant 0 : i32
    return %c0_i32, %c0_i32_0 : i32, i32
  }
  func.func @transform_3(%arg0: i32) -> (i32, i32) {
    %c0_i32 = arith.constant 0 : i32
    %c0_i32_0 = arith.constant 0 : i32
    %c0_i32_1 = arith.constant 0 : i32
    return %c0_i32, %c0_i32_0 : i32, i32
  }
}

</mosaic_0001>

<llo_original>
// kernel: tpu_custom_call.1
$region0: #{tpu_custom_call.1}
  #allocation0 [shape = 'u32[]', space=smem, size = 0x4, offset = 0x4, fixed_abs, tag = 'smem constant byte address 0x4 - core index']
  #allocation1 [shape = 'u32[144,128]{1,0:T(1,128)}', space=vmem, size = 0x12000, scoped, tag = 'internal scratch']
  %s0 = inlined_call_operand.hbm [shape: f32[32,768], index: 0, kind: input, shape index: {}]
  %s1 = inlined_call_operand.hbm [shape: bf16[768,768], index: 1, kind: input, shape index: {}]
  %s2 = inlined_call_operand.hbm [shape: f32[1,768], index: 2, kind: input, shape index: {}]
  %s3 = inlined_call_operand.hbm [shape: f32[32,768], index: 3, kind: output, shape index: {}]
  %s4 = sld [smem:[#allocation0]]
  $region34: #{tpu_custom_call.1} parent=0
    _
  %s6 = ssub.s32 1, %s4
  %s7 = scalar_select 0, %s6, %s4
  $region1: #{tpu_custom_call.1} parent=0
    #allocation2 [shape = 'u8[98304]{0}', space=vmem, size = 0x18000, scoped, tag = 'input window, operand 0, single buffered']
    #allocation3 [shape = 's32[1]{0}', space=sflag, size = 0x4, scoped, tag = 'scoped memory for tpu_custom_call.1']
    #allocation4 [shape = 's32[1]{0}', space=sflag, size = 0x4, scoped, tag = 'scoped memory for tpu_custom_call.1']
    #allocation5 [shape = 'u8[1179648]{0}', space=vmem, size = 0x120000, scoped, tag = 'input window, operand 1, single buffered']
    #allocation6 [shape = 's32[1]{0}', space=sflag, size = 0x4, scoped, tag = 'scoped memory for tpu_custom_call.1']
    #allocation7 [shape = 'u8[3072]{0}', space=vmem, size = 0xc00, scoped, tag = 'input window, operand 2, single buffered']
    #allocation8 [shape = 'u8[98304]{0}', space=vmem, size = 0x18000, scoped, tag = 'output window, operand 0, single buffered']
    %8 = vsyncpa [#allocation3], 0
    %9 = vsyncpa [#allocation6], 0
    %10 = vsyncpa [#allocation4], 0
    // Predicated region
    $region2: #{tpu_custom_call.1} parent=1 // pred_check
      _
    $region3: #{tpu_custom_call.1} parent=1 // pred_check_branch
      %12 = sbr.rel (0) target = $region5
    $region4: #{tpu_custom_call.1} parent=1 // pred_region
      %s14 = ssub.s32 3072, 3072
      %15 = vsyncadd [#allocation3], %s14
      %s16 = sshll.u32 [#allocation2], 4
      %s17 = int_to_ptr.vmem [resolvable:$true] %s16
      %22 = dma.hbm_to_vmem [thread:$0]  %s0, 3072, %s17, [#allocation3], 768, 768, 48
    $region5: #{tpu_custom_call.1} parent=1 // pred_fallthru
      _
    // Predicated region
    $region6: #{tpu_custom_call.1} parent=1 // pred_check
      _
    $region7: #{tpu_custom_call.1} parent=1 // pred_check_branch
      %24 = sbr.rel (0) target = $region9
    $region8: #{tpu_custom_call.1} parent=1 // pred_region
      %s26 = ssub.s32 36864, 36864
      %27 = vsyncadd [#allocation6], %s26
      %s28 = sshll.u32 [#allocation5], 4
      %s29 = int_to_ptr.vmem [resolvable:$true] %s28
      %34 = dma.hbm_to_vmem [thread:$0]  %s1, 36864, %s29, [#allocation6], 384, 384, 24
    $region9: #{tpu_custom_call.1} parent=1 // pred_fallthru
      _
    // Predicated region
    $region10: #{tpu_custom_call.1} parent=1 // pred_check
      _
    $region11: #{tpu_custom_call.1} parent=1 // pred_check_branch
      %36 = sbr.rel (0) target = $region13
    $region12: #{tpu_custom_call.1} parent=1 // pred_region
      %s38 = ssub.s32 96, 96
      %39 = vsyncadd [#allocation6], %s38
      %s41 = sshll.u32 [#allocation7], 4
      %s42 = int_to_ptr.vmem [resolvable:$true] %s41
      %44 = dma.hbm_to_vmem [thread:$0]  %s2, 96, %s42, [#allocation6]
    $region13: #{tpu_custom_call.1} parent=1 // pred_fallthru
      _
    // Predicated region
    $region14: #{tpu_custom_call.1} parent=1 // pred_check
      _
    $region15: #{tpu_custom_call.1} parent=1 // pred_check_branch
      %46 = sbr.rel (0) target = $region17
    $region16: #{tpu_custom_call.1} parent=1 // pred_region
      %47 = dma.done [#allocation3], 3072
    $region17: #{tpu_custom_call.1} parent=1 // pred_fallthru
      _
    // Predicated region
    $region18: #{tpu_custom_call.1} parent=1 // pred_check
      _
    $region19: #{tpu_custom_call.1} parent=1 // pred_check_branch
      %49 = sbr.rel (0) target = $region21
    $region20: #{tpu_custom_call.1} parent=1 // pred_region
      %50 = dma.done [#allocation6], 36864
    $region21: #{tpu_custom_call.1} parent=1 // pred_fallthru
      _
    // Predicated region
    $region22: #{tpu_custom_call.1} parent=1 // pred_check
      _
    $region23: #{tpu_custom_call.1} parent=1 // pred_check_branch
      %52 = sbr.rel (0) target = $region25
    $region24: #{tpu_custom_call.1} parent=1 // pred_region
      %53 = dma.done [#allocation6], 96
    $region25: #{tpu_custom_call.1} parent=1 // pred_fallthru
      _
    %v54 = vld [vmem:[#allocation2] sm:$0xff]
    %v55 = vld [vmem:[#allocation2 + $0x8] sm:$0xff]
    %v56 = vld [vmem:[#allocation2 + $0x10] sm:$0xff]
    %v57 = vld [vmem:[#allocation2 + $0x18] sm:$0xff]
    %v58 = vld [vmem:[#allocation2 + $0x20] sm:$0xff]
    %v59 = vld [vmem:[#allocation2 + $0x28] sm:$0xff]
    %v60 = vld [vmem:[#allocation2 + $0x30] sm:$0xff]
    %v61 = vld [vmem:[#allocation2 + $0x38] sm:$0xff]
    %v62 = vld [vmem:[#allocation2 + $0x40] sm:$0xff]
    %v63 = vld [vmem:[#allocation2 + $0x48] sm:$0xff]
    %v64 = vld [vmem:[#allocation2 + $0x50] sm:$0xff]
    %v65 = vld [vmem:[#allocation2 + $0x58] sm:$0xff]
    %v66 = vld [vmem:[#allocation2 + $0x60] sm:$0xff]
    %v67 = vld [vmem:[#allocation2 + $0x68] sm:$0xff]
    %v68 = vld [vmem:[#allocation2 + $0x70] sm:$0xff]
    %v69 = vld [vmem:[#allocation2 + $0x78] sm:$0xff]
    %v70 = vld [vmem:[#allocation2 + $0x80] sm:$0xff]
    %v71 = vld [vmem:[#allocation2 + $0x88] sm:$0xff]
    %v72 = vld [vmem:[#allocation2 + $0x90] sm:$0xff]
    %v73 = vld [vmem:[#allocation2 + $0x98] sm:$0xff]
    %v74 = vld [vmem:[#allocation2 + $0xa0] sm:$0xff]
    %v75 = vld [vmem:[#allocation2 + $0xa8] sm:$0xff]
    %v76 = vld [vmem:[#allocation2 + $0xb0] sm:$0xff]
    %v77 = vld [vmem:[#allocation2 + $0xb8] sm:$0xff]
    %v78 = vpack.c.bf16 %v60, %v54
    %v79 = vpack.c.bf16 %v61, %v55
    %v80 = vpack.c.bf16 %v62, %v56
    %v81 = vpack.c.bf16 %v63, %v57
    %v82 = vpack.c.bf16 %v64, %v58
    %v83 = vpack.c.bf16 %v65, %v59
    %v84 = vpack.c.bf16 %v72, %v66
    %v85 = vpack.c.bf16 %v73, %v67
    %v86 = vpack.c.bf16 %v74, %v68
    %v87 = vpack.c.bf16 %v75, %v69
    %v88 = vpack.c.bf16 %v76, %v70
    %v89 = vpack.c.bf16 %v77, %v71
    %v90 = vld [vmem:[#allocation5] sm:$0xff]
    %v91 = vld [vmem:[#allocation5 + $0x8] sm:$0xff]
    %v92 = vld [vmem:[#allocation5 + $0x10] sm:$0xff]
    %v93 = vld [vmem:[#allocation5 + $0x18] sm:$0xff]
    %v94 = vld [vmem:[#allocation5 + $0x20] sm:$0xff]
    %v95 = vld [vmem:[#allocation5 + $0x28] sm:$0xff]
    %v96 = vld [vmem:[#allocation5 + $0x30] sm:$0xff]
    %v97 = vld [vmem:[#allocation5 + $0x38] sm:$0xff]
    %v98 = vld [vmem:[#allocation5 + $0x40] sm:$0xff]
    %v99 = vld [vmem:[#allocation5 + $0x48] sm:$0xff]
    %v100 = vld [vmem:[#allocation5 + $0x50] sm:$0xff]
    %v101 = vld [vmem:[#allocation5 + $0x58] sm:$0xff]
    %v102 = vld [vmem:[#allocation5 + $0x60] sm:$0xff]
    %v103 = vld [vmem:[#allocation5 + $0x68] sm:$0xff]
    %v104 = vld [vmem:[#allocation5 + $0x70] sm:$0xff]
    %v105 = vld [vmem:[#allocation5 + $0x78] sm:$0xff]
    %v106 = vld [vmem:[#allocation5 + $0x80] sm:$0xff]
    %v107 = vld [vmem:[#allocation5 + $0x88] sm:$0xff]
    %v108 = vld [vmem:[#allocation5 + $0x90] sm:$0xff]
    %v109 = vld [vmem:[#allocation5 + $0x98] sm:$0xff]
    %v110 = vld [vmem:[#allocation5 + $0xa0] sm:$0xff]
    %v111 = vld [vmem:[#allocation5 + $0xa8] sm:$0xff]
    %v112 = vld [vmem:[#allocation5 + $0xb0] sm:$0xff]
    %v113 = vld [vmem:[#allocation5 + $0xb8] sm:$0xff]
    %v114 = vld [vmem:[#allocation5 + $0xc0] sm:$0xff]
    %v115 = vld [vmem:[#allocation5 + $0xc8] sm:$0xff]
    %v116 = vld [vmem:[#allocation5 + $0xd0] sm:$0xff]
    %v117 = vld [vmem:[#allocation5 + $0xd8] sm:$0xff]
    %v118 = vld [vmem:[#allocation5 + $0xe0] sm:$0xff]
    %v119 = vld [vmem:[#allocation5 + $0xe8] sm:$0xff]
    %v120 = vld [vmem:[#allocation5 + $0xf0] sm:$0xff]
    %v121 = vld [vmem:[#allocation5 + $0xf8] sm:$0xff]
    %v122 = vld [vmem:[#allocation5 + $0x100] sm:$0xff]
    %v123 = vld [vmem:[#allocation5 + $0x108] sm:$0xff]
    %v124 = vld [vmem:[#allocation5 + $0x110] sm:$0xff]
    %v125 = vld [vmem:[#allocation5 + $0x118] sm:$0xff]
    %v126 = vld [vmem:[#allocation5 + $0x120] sm:$0xff]
    %v127 = vld [vmem:[#allocation5 + $0x128] sm:$0xff]
    %v128 = vld [vmem:[#allocation5 + $0x130] sm:$0xff]
    %v129 = vld [vmem:[#allocation5 + $0x138] sm:$0xff]
    %v130 = vld [vmem:[#allocation5 + $0x140] sm:$0xff]
    %v131 = vld [vmem:[#allocation5 + $0x148] sm:$0xff]
    %v132 = vld [vmem:[#allocation5 + $0x150] sm:$0xff]
    %v133 = vld [vmem:[#allocation5 + $0x158] sm:$0xff]
    %v134 = vld [vmem:[#allocation5 + $0x160] sm:$0xff]
    %v135 = vld [vmem:[#allocation5 + $0x168] sm:$0xff]
    %v136 = vld [vmem:[#allocation5 + $0x170] sm:$0xff]
    %v137 = vld [vmem:[#allocation5 + $0x178] sm:$0xff]
    %v138 = vld [vmem:[#allocation5 + $0x180] sm:$0xff]
    %v139 = vld [vmem:[#allocation5 + $0x188] sm:$0xff]
    %v140 = vld [vmem:[#allocation5 + $0x190] sm:$0xff]
    %v141 = vld [vmem:[#allocation5 + $0x198] sm:$0xff]
    %v142 = vld [vmem:[#allocation5 + $0x1a0] sm:$0xff]
    %v143 = vld [vmem:[#allocation5 + $0x1a8] sm:$0xff]
    %v144 = vld [vmem:[#allocation5 + $0x1b0] sm:$0xff]
    %v145 = vld [vmem:[#allocation5 + $0x1b8] sm:$0xff]
    %v146 = vld [vmem:[#allocation5 + $0x1c0] sm:$0xff]
    %v147 = vld [vmem:[#allocation5 + $0x1c8] sm:$0xff]
    %v148 = vld [vmem:[#allocation5 + $0x1d0] sm:$0xff]
    %v149 = vld [vmem:[#allocation5 + $0x1d8] sm:$0xff]
    %v150 = vld [vmem:[#allocation5 + $0x1e0] sm:$0xff]
    %v151 = vld [vmem:[#allocation5 + $0x1e8] sm:$0xff]
    %v152 = vld [vmem:[#allocation5 + $0x1f0] sm:$0xff]
    %v153 = vld [vmem:[#allocation5 + $0x1f8] sm:$0xff]
    %v154 = vld [vmem:[#allocation5 + $0x200] sm:$0xff]
    %v155 = vld [vmem:[#allocation5 + $0x208] sm:$0xff]
    %v156 = vld [vmem:[#allocation5 + $0x210] sm:$0xff]
    %v157 = vld [vmem:[#allocation5 + $0x218] sm:$0xff]
    %v158 = vld [vmem:[#allocation5 + $0x220] sm:$0xff]
    %v159 = vld [vmem:[#allocation5 + $0x228] sm:$0xff]
    %v160 = vld [vmem:[#allocation5 + $0x230] sm:$0xff]
    %v161 = vld [vmem:[#allocation5 + $0x238] sm:$0xff]
    %v162 = vld [vmem:[#allocation5 + $0x240] sm:$0xff]
    %v163 = vld [vmem:[#allocation5 + $0x248] sm:$0xff]
    %v164 = vld [vmem:[#allocation5 + $0x250] sm:$0xff]
    %v165 = vld [vmem:[#allocation5 + $0x258] sm:$0xff]
    %v166 = vld [vmem:[#allocation5 + $0x260] sm:$0xff]
    %v167 = vld [vmem:[#allocation5 + $0x268] sm:$0xff]
    %v168 = vld [vmem:[#allocation5 + $0x270] sm:$0xff]
    %v169 = vld [vmem:[#allocation5 + $0x278] sm:$0xff]
    %v170 = vld [vmem:[#allocation5 + $0x280] sm:$0xff]
    %v171 = vld [vmem:[#allocation5 + $0x288] sm:$0xff]
    %v172 = vld [vmem:[#allocation5 + $0x290] sm:$0xff]
    %v173 = vld [vmem:[#allocation5 + $0x298] sm:$0xff]
    %v174 = vld [vmem:[#allocation5 + $0x2a0] sm:$0xff]
    %v175 = vld [vmem:[#allocation5 + $0x2a8] sm:$0xff]
    %v176 = vld [vmem:[#allocation5 + $0x2b0] sm:$0xff]
    %v177 = vld [vmem:[#allocation5 + $0x2b8] sm:$0xff]
    %v178 = vld [vmem:[#allocation5 + $0x2c0] sm:$0xff]
    %v179 = vld [vmem:[#allocation5 + $0x2c8] sm:$0xff]
    %v180 = vld [vmem:[#allocation5 + $0x2d0] sm:$0xff]
    %v181 = vld [vmem:[#allocation5 + $0x2d8] sm:$0xff]
    %v182 = vld [vmem:[#allocation5 + $0x2e0] sm:$0xff]
    %v183 = vld [vmem:[#allocation5 + $0x2e8] sm:$0xff]
    %v184 = vld [vmem:[#allocation5 + $0x2f0] sm:$0xff]
    %v185 = vld [vmem:[#allocation5 + $0x2f8] sm:$0xff]
    %v186 = vld [vmem:[#allocation5 + $0x300] sm:$0xff]
    %v187 = vld [vmem:[#allocation5 + $0x308] sm:$0xff]
    %v188 = vld [vmem:[#allocation5 + $0x310] sm:$0xff]
    %v189 = vld [vmem:[#allocation5 + $0x318] sm:$0xff]
    %v190 = vld [vmem:[#allocation5 + $0x320] sm:$0xff]
    %v191 = vld [vmem:[#allocation5 + $0x328] sm:$0xff]
    %v192 = vld [vmem:[#allocation5 + $0x330] sm:$0xff]
    %v193 = vld [vmem:[#allocation5 + $0x338] sm:$0xff]
    %v194 = vld [vmem:[#allocation5 + $0x340] sm:$0xff]
    %v195 = vld [vmem:[#allocation5 + $0x348] sm:$0xff]
    %v196 = vld [vmem:[#allocation5 + $0x350] sm:$0xff]
    %v197 = vld [vmem:[#allocation5 + $0x358] sm:$0xff]
    %v198 = vld [vmem:[#allocation5 + $0x360] sm:$0xff]
    %v199 = vld [vmem:[#allocation5 + $0x368] sm:$0xff]
    %v200 = vld [vmem:[#allocation5 + $0x370] sm:$0xff]
    %v201 = vld [vmem:[#allocation5 + $0x378] sm:$0xff]
    %v202 = vld [vmem:[#allocation5 + $0x380] sm:$0xff]
    %v203 = vld [vmem:[#allocation5 + $0x388] sm:$0xff]
    %v204 = vld [vmem:[#allocation5 + $0x390] sm:$0xff]
    %v205 = vld [vmem:[#allocation5 + $0x398] sm:$0xff]
    %v206 = vld [vmem:[#allocation5 + $0x3a0] sm:$0xff]
    %v207 = vld [vmem:[#allocation5 + $0x3a8] sm:$0xff]
    %v208 = vld [vmem:[#allocation5 + $0x3b0] sm:$0xff]
    %v209 = vld [vmem:[#allocation5 + $0x3b8] sm:$0xff]
    %v210 = vld [vmem:[#allocation5 + $0x3c0] sm:$0xff]
    %v211 = vld [vmem:[#allocation5 + $0x3c8] sm:$0xff]
    %v212 = vld [vmem:[#allocation5 + $0x3d0] sm:$0xff]
    %v213 = vld [vmem:[#allocation5 + $0x3d8] sm:$0xff]
    %v214 = vld [vmem:[#allocation5 + $0x3e0] sm:$0xff]
    %v215 = vld [vmem:[#allocation5 + $0x3e8] sm:$0xff]
    %v216 = vld [vmem:[#allocation5 + $0x3f0] sm:$0xff]
    %v217 = vld [vmem:[#allocation5 + $0x3f8] sm:$0xff]
    %v218 = vld [vmem:[#allocation5 + $0x400] sm:$0xff]
    %v219 = vld [vmem:[#allocation5 + $0x408] sm:$0xff]
    %v220 = vld [vmem:[#allocation5 + $0x410] sm:$0xff]
    %v221 = vld [vmem:[#allocation5 + $0x418] sm:$0xff]
    %v222 = vld [vmem:[#allocation5 + $0x420] sm:$0xff]
    %v223 = vld [vmem:[#allocation5 + $0x428] sm:$0xff]
    %v224 = vld [vmem:[#allocation5 + $0x430] sm:$0xff]
    %v225 = vld [vmem:[#allocation5 + $0x438] sm:$0xff]
    %v226 = vld [vmem:[#allocation5 + $0x440] sm:$0xff]
    %v227 = vld [vmem:[#allocation5 + $0x448] sm:$0xff]
    %v228 = vld [vmem:[#allocation5 + $0x450] sm:$0xff]
    %v229 = vld [vmem:[#allocation5 + $0x458] sm:$0xff]
    %v230 = vld [vmem:[#allocation5 + $0x460] sm:$0xff]
    %v231 = vld [vmem:[#allocation5 + $0x468] sm:$0xff]
    %v232 = vld [vmem:[#allocation5 + $0x470] sm:$0xff]
    %v233 = vld [vmem:[#allocation5 + $0x478] sm:$0xff]
    %v234 = vld [vmem:[#allocation5 + $0x480] sm:$0xff]
    %v235 = vld [vmem:[#allocation5 + $0x488] sm:$0xff]
    %v236 = vld [vmem:[#allocation5 + $0x490] sm:$0xff]
    %v237 = vld [vmem:[#allocation5 + $0x498] sm:$0xff]
    %v238 = vld [vmem:[#allocation5 + $0x4a0] sm:$0xff]
    %v239 = vld [vmem:[#allocation5 + $0x4a8] sm:$0xff]
    %v240 = vld [vmem:[#allocation5 + $0x4b0] sm:$0xff]
    %v241 = vld [vmem:[#allocation5 + $0x4b8] sm:$0xff]
    %v242 = vld [vmem:[#allocation5 + $0x4c0] sm:$0xff]
    %v243 = vld [vmem:[#allocation5 + $0x4c8] sm:$0xff]
    %v244 = vld [vmem:[#allocation5 + $0x4d0] sm:$0xff]
    %v245 = vld [vmem:[#allocation5 + $0x4d8] sm:$0xff]
    %v246 = vld [vmem:[#allocation5 + $0x4e0] sm:$0xff]
    %v247 = vld [vmem:[#allocation5 + $0x4e8] sm:$0xff]
    %v248 = vld [vmem:[#allocation5 + $0x4f0] sm:$0xff]
    %v249 = vld [vmem:[#allocation5 + $0x4f8] sm:$0xff]
    %v250 = vld [vmem:[#allocation5 + $0x500] sm:$0xff]
    %v251 = vld [vmem:[#allocation5 + $0x508] sm:$0xff]
    %v252 = vld [vmem:[#allocation5 + $0x510] sm:$0xff]
    %v253 = vld [vmem:[#allocation5 + $0x518] sm:$0xff]
    %v254 = vld [vmem:[#allocation5 + $0x520] sm:$0xff]
    %v255 = vld [vmem:[#allocation5 + $0x528] sm:$0xff]
    %v256 = vld [vmem:[#allocation5 + $0x530] sm:$0xff]
    %v257 = vld [vmem:[#allocation5 + $0x538] sm:$0xff]
    %v258 = vld [vmem:[#allocation5 + $0x540] sm:$0xff]
    %v259 = vld [vmem:[#allocation5 + $0x548] sm:$0xff]
    %v260 = vld [vmem:[#allocation5 + $0x550] sm:$0xff]
    %v261 = vld [vmem:[#allocation5 + $0x558] sm:$0xff]
    %v262 = vld [vmem:[#allocation5 + $0x560] sm:$0xff]
    %v263 = vld [vmem:[#allocation5 + $0x568] sm:$0xff]
    %v264 = vld [vmem:[#allocation5 + $0x570] sm:$0xff]
    %v265 = vld [vmem:[#allocation5 + $0x578] sm:$0xff]
    %v266 = vld [vmem:[#allocation5 + $0x580] sm:$0xff]
    %v267 = vld [vmem:[#allocation5 + $0x588] sm:$0xff]
    %v268 = vld [vmem:[#allocation5 + $0x590] sm:$0xff]
    %v269 = vld [vmem:[#allocation5 + $0x598] sm:$0xff]
    %v270 = vld [vmem:[#allocation5 + $0x5a0] sm:$0xff]
    %v271 = vld [vmem:[#allocation5 + $0x5a8] sm:$0xff]
    %v272 = vld [vmem:[#allocation5 + $0x5b0] sm:$0xff]
    %v273 = vld [vmem:[#allocation5 + $0x5b8] sm:$0xff]
    %v274 = vld [vmem:[#allocation5 + $0x5c0] sm:$0xff]
    %v275 = vld [vmem:[#allocation5 + $0x5c8] sm:$0xff]
    %v276 = vld [vmem:[#allocation5 + $0x5d0] sm:$0xff]
    %v277 = vld [vmem:[#allocation5 + $0x5d8] sm:$0xff]
    %v278 = vld [vmem:[#allocation5 + $0x5e0] sm:$0xff]
    %v279 = vld [vmem:[#allocation5 + $0x5e8] sm:$0xff]
    %v280 = vld [vmem:[#allocation5 + $0x5f0] sm:$0xff]
    %v281 = vld [vmem:[#allocation5 + $0x5f8] sm:$0xff]
    %v282 = vld [vmem:[#allocation5 + $0x600] sm:$0xff]
    %v283 = vld [vmem:[#allocation5 + $0x608] sm:$0xff]
    %v284 = vld [vmem:[#allocation5 + $0x610] sm:$0xff]
    %v285 = vld [vmem:[#allocation5 + $0x618] sm:$0xff]
    %v286 = vld [vmem:[#allocation5 + $0x620] sm:$0xff]
    %v287 = vld [vmem:[#allocation5 + $0x628] sm:$0xff]
    %v288 = vld [vmem:[#allocation5 + $0x630] sm:$0xff]
    %v289 = vld [vmem:[#allocation5 + $0x638] sm:$0xff]
    %v290 = vld [vmem:[#allocation5 + $0x640] sm:$0xff]
    %v291 = vld [vmem:[#allocation5 + $0x648] sm:$0xff]
    %v292 = vld [vmem:[#allocation5 + $0x650] sm:$0xff]
    %v293 = vld [vmem:[#allocation5 + $0x658] sm:$0xff]
    %v294 = vld [vmem:[#allocation5 + $0x660] sm:$0xff]
    %v295 = vld [vmem:[#allocation5 + $0x668] sm:$0xff]
    %v296 = vld [vmem:[#allocation5 + $0x670] sm:$0xff]
    %v297 = vld [vmem:[#allocation5 + $0x678] sm:$0xff]
    %v298 = vld [vmem:[#allocation5 + $0x680] sm:$0xff]
    %v299 = vld [vmem:[#allocation5 + $0x688] sm:$0xff]
    %v300 = vld [vmem:[#allocation5 + $0x690] sm:$0xff]
    %v301 = vld [vmem:[#allocation5 + $0x698] sm:$0xff]
    %v302 = vld [vmem:[#allocation5 + $0x6a0] sm:$0xff]
    %v303 = vld [vmem:[#allocation5 + $0x6a8] sm:$0xff]
    %v304 = vld [vmem:[#allocation5 + $0x6b0] sm:$0xff]
    %v305 = vld [vmem:[#allocation5 + $0x6b8] sm:$0xff]
    %v306 = vld [vmem:[#allocation5 + $0x6c0] sm:$0xff]
    %v307 = vld [vmem:[#allocation5 + $0x6c8] sm:$0xff]
    %v308 = vld [vmem:[#allocation5 + $0x6d0] sm:$0xff]
    %v309 = vld [vmem:[#allocation5 + $0x6d8] sm:$0xff]
    %v310 = vld [vmem:[#allocation5 + $0x6e0] sm:$0xff]
    %v311 = vld [vmem:[#allocation5 + $0x6e8] sm:$0xff]
    %v312 = vld [vmem:[#allocation5 + $0x6f0] sm:$0xff]
    %v313 = vld [vmem:[#allocation5 + $0x6f8] sm:$0xff]
    %v314 = vld [vmem:[#allocation5 + $0x700] sm:$0xff]
    %v315 = vld [vmem:[#allocation5 + $0x708] sm:$0xff]
    %v316 = vld [vmem:[#allocation5 + $0x710] sm:$0xff]
    %v317 = vld [vmem:[#allocation5 + $0x718] sm:$0xff]
    %v318 = vld [vmem:[#allocation5 + $0x720] sm:$0xff]
    %v319 = vld [vmem:[#allocation5 + $0x728] sm:$0xff]
    %v320 = vld [vmem:[#allocation5 + $0x730] sm:$0xff]
    %v321 = vld [vmem:[#allocation5 + $0x738] sm:$0xff]
    %v322 = vld [vmem:[#allocation5 + $0x740] sm:$0xff]
    %v323 = vld [vmem:[#allocation5 + $0x748] sm:$0xff]
    %v324 = vld [vmem:[#allocation5 + $0x750] sm:$0xff]
    %v325 = vld [vmem:[#allocation5 + $0x758] sm:$0xff]
    %v326 = vld [vmem:[#allocation5 + $0x760] sm:$0xff]
    %v327 = vld [vmem:[#allocation5 + $0x768] sm:$0xff]
    %v328 = vld [vmem:[#allocation5 + $0x770] sm:$0xff]
    %v329 = vld [vmem:[#allocation5 + $0x778] sm:$0xff]
    %v330 = vld [vmem:[#allocation5 + $0x780] sm:$0xff]
    %v331 = vld [vmem:[#allocation5 + $0x788] sm:$0xff]
    %v332 = vld [vmem:[#allocation5 + $0x790] sm:$0xff]
    %v333 = vld [vmem:[#allocation5 + $0x798] sm:$0xff]
    %v334 = vld [vmem:[#allocation5 + $0x7a0] sm:$0xff]
    %v335 = vld [vmem:[#allocation5 + $0x7a8] sm:$0xff]
    %v336 = vld [vmem:[#allocation5 + $0x7b0] sm:$0xff]
    %v337 = vld [vmem:[#allocation5 + $0x7b8] sm:$0xff]
    %v338 = vld [vmem:[#allocation5 + $0x7c0] sm:$0xff]
    %v339 = vld [vmem:[#allocation5 + $0x7c8] sm:$0xff]
    %v340 = vld [vmem:[#allocation5 + $0x7d0] sm:$0xff]
    %v341 = vld [vmem:[#allocation5 + $0x7d8] sm:$0xff]
    %v342 = vld [vmem:[#allocation5 + $0x7e0] sm:$0xff]
    %v343 = vld [vmem:[#allocation5 + $0x7e8] sm:$0xff]
    %v344 = vld [vmem:[#allocation5 + $0x7f0] sm:$0xff]
    %v345 = vld [vmem:[#allocation5 + $0x7f8] sm:$0xff]
    %v346 = vld [vmem:[#allocation5 + $0x800] sm:$0xff]
    %v347 = vld [vmem:[#allocation5 + $0x808] sm:$0xff]
    %v348 = vld [vmem:[#allocation5 + $0x810] sm:$0xff]
    %v349 = vld [vmem:[#allocation5 + $0x818] sm:$0xff]
    %v350 = vld [vmem:[#allocation5 + $0x820] sm:$0xff]
    %v351 = vld [vmem:[#allocation5 + $0x828] sm:$0xff]
    %v352 = vld [vmem:[#allocation5 + $0x830] sm:$0xff]
    %v353 = vld [vmem:[#allocation5 + $0x838] sm:$0xff]
    %v354 = vld [vmem:[#allocation5 + $0x840] sm:$0xff]
    %v355 = vld [vmem:[#allocation5 + $0x848] sm:$0xff]
    %v356 = vld [vmem:[#allocation5 + $0x850] sm:$0xff]
    %v357 = vld [vmem:[#allocation5 + $0x858] sm:$0xff]
    %v358 = vld [vmem:[#allocation5 + $0x860] sm:$0xff]
    %v359 = vld [vmem:[#allocation5 + $0x868] sm:$0xff]
    %v360 = vld [vmem:[#allocation5 + $0x870] sm:$0xff]
    %v361 = vld [vmem:[#allocation5 + $0x878] sm:$0xff]
    %v362 = vld [vmem:[#allocation5 + $0x880] sm:$0xff]
    %v363 = vld [vmem:[#allocation5 + $0x888] sm:$0xff]
    %v364 = vld [vmem:[#allocation5 + $0x890] sm:$0xff]
    %v365 = vld [vmem:[#allocation5 + $0x898] sm:$0xff]
    %v366 = vld [vmem:[#allocation5 + $0x8a0] sm:$0xff]
    %v367 = vld [vmem:[#allocation5 + $0x8a8] sm:$0xff]
    %v368 = vld [vmem:[#allocation5 + $0x8b0] sm:$0xff]
    %v369 = vld [vmem:[#allocation5 + $0x8b8] sm:$0xff]
    %v370 = vld [vmem:[#allocation5 + $0x8c0] sm:$0xff]
    %v371 = vld [vmem:[#allocation5 + $0x8c8] sm:$0xff]
    %v372 = vld [vmem:[#allocation5 + $0x8d0] sm:$0xff]
    %v373 = vld [vmem:[#allocation5 + $0x8d8] sm:$0xff]
    %v374 = vld [vmem:[#allocation5 + $0x8e0] sm:$0xff]
    %v375 = vld [vmem:[#allocation5 + $0x8e8] sm:$0xff]
    %v376 = vld [vmem:[#allocation5 + $0x8f0] sm:$0xff]
    %v377 = vld [vmem:[#allocation5 + $0x8f8] sm:$0xff]
    %v378 = vld [vmem:[#allocation7] sm:$0x3f]
    %v380 = vlaneseq
    %v381 = vshrl.u32 %v380, 7
    %v382 = vsub.s32 0, %v381
    %v383 = vrot.slane %v378, %v382
    %v384 = vlaneseq
    %v385 = vshrl.u32 %v384, 7
    %v386 = vsub.s32 1, %v385
    %v387 = vrot.slane %v378, %v386
    %v388 = vlaneseq
    %v389 = vshrl.u32 %v388, 7
    %v390 = vsub.s32 2, %v389
    %v391 = vrot.slane %v378, %v390
    %v392 = vlaneseq
    %v393 = vshrl.u32 %v392, 7
    %v394 = vsub.s32 3, %v393
    %v395 = vrot.slane %v378, %v394
    %v396 = vlaneseq
    %v397 = vshrl.u32 %v396, 7
    %v398 = vsub.s32 4, %v397
    %v399 = vrot.slane %v378, %v398
    %v400 = vlaneseq
    %v401 = vshrl.u32 %v400, 7
    %v402 = vsub.s32 5, %v401
    %v403 = vrot.slane %v378, %v402
    %v698 = vunpack.c.l.b16 %v90
    %v699 = vunpack.c.h.b16 %v90
    %v700 = vunpack.c.l.b16 %v91
    %v701 = vunpack.c.h.b16 %v91
    %v702 = vunpack.c.l.b16 %v92
    %v703 = vunpack.c.h.b16 %v92
    %v704 = vunpack.c.l.b16 %v93
    %v705 = vunpack.c.h.b16 %v93
    %v706 = vunpack.c.l.b16 %v94
    %v707 = vunpack.c.h.b16 %v94
    %v708 = vunpack.c.l.b16 %v95
    %v709 = vunpack.c.h.b16 %v95
    %v710 = vunpack.c.l.b16 %v96
    %v711 = vunpack.c.h.b16 %v96
    %v712 = vunpack.c.l.b16 %v97
    %v713 = vunpack.c.h.b16 %v97
    %v714 = vunpack.c.l.b16 %v98
    %v715 = vunpack.c.h.b16 %v98
    %v716 = vunpack.c.l.b16 %v99
    %v717 = vunpack.c.h.b16 %v99
    %v718 = vunpack.c.l.b16 %v100
    %v719 = vunpack.c.h.b16 %v100
    %v720 = vunpack.c.l.b16 %v101
    %v721 = vunpack.c.h.b16 %v101
    %v722 = vunpack.c.l.b16 %v102
    %v723 = vunpack.c.h.b16 %v102
    %v724 = vunpack.c.l.b16 %v103
    %v725 = vunpack.c.h.b16 %v103
    %v726 = vunpack.c.l.b16 %v104
    %v727 = vunpack.c.h.b16 %v104
    %v728 = vunpack.c.l.b16 %v105
    %v729 = vunpack.c.h.b16 %v105
    %v730 = vunpack.c.l.b16 %v106
    %v731 = vunpack.c.h.b16 %v106
    %v732 = vunpack.c.l.b16 %v107
    %v733 = vunpack.c.h.b16 %v107
    %v734 = vunpack.c.l.b16 %v108
    %v735 = vunpack.c.h.b16 %v108
    %v736 = vunpack.c.l.b16 %v109
    %v737 = vunpack.c.h.b16 %v109
    %v738 = vunpack.c.l.b16 %v110
    %v739 = vunpack.c.h.b16 %v110
    %v740 = vunpack.c.l.b16 %v111
    %v741 = vunpack.c.h.b16 %v111
    %v742 = vunpack.c.l.b16 %v112
    %v743 = vunpack.c.h.b16 %v112
    %v744 = vunpack.c.l.b16 %v113
    %v745 = vunpack.c.h.b16 %v113
    %v746 = vunpack.c.l.b16 %v114
    %v747 = vunpack.c.h.b16 %v114
    %v748 = vunpack.c.l.b16 %v115
    %v749 = vunpack.c.h.b16 %v115
    %v750 = vunpack.c.l.b16 %v116
    %v751 = vunpack.c.h.b16 %v116
    %v752 = vunpack.c.l.b16 %v117
    %v753 = vunpack.c.h.b16 %v117
    %v754 = vunpack.c.l.b16 %v118
    %v755 = vunpack.c.h.b16 %v118
    %v756 = vunpack.c.l.b16 %v119
    %v757 = vunpack.c.h.b16 %v119
    %v758 = vunpack.c.l.b16 %v120
    %v759 = vunpack.c.h.b16 %v120
    %v760 = vunpack.c.l.b16 %v121
    %v761 = vunpack.c.h.b16 %v121
    %v762 = vunpack.c.l.b16 %v122
    %v763 = vunpack.c.h.b16 %v122
    %v764 = vunpack.c.l.b16 %v123
    %v765 = vunpack.c.h.b16 %v123
    %v766 = vunpack.c.l.b16 %v124
    %v767 = vunpack.c.h.b16 %v124
    %v768 = vunpack.c.l.b16 %v125
    %v769 = vunpack.c.h.b16 %v125
    %v770 = vunpack.c.l.b16 %v126
    %v771 = vunpack.c.h.b16 %v126
    %v772 = vunpack.c.l.b16 %v127
    %v773 = vunpack.c.h.b16 %v127
    %v774 = vunpack.c.l.b16 %v128
    %v775 = vunpack.c.h.b16 %v128
    %v776 = vunpack.c.l.b16 %v129
    %v777 = vunpack.c.h.b16 %v129
    %v778 = vunpack.c.l.b16 %v130
    %v779 = vunpack.c.h.b16 %v130
    %v780 = vunpack.c.l.b16 %v131
    %v781 = vunpack.c.h.b16 %v131
    %v782 = vunpack.c.l.b16 %v132
    %v783 = vunpack.c.h.b16 %v132
    %v784 = vunpack.c.l.b16 %v133
    %v785 = vunpack.c.h.b16 %v133
    %v786 = vunpack.c.l.b16 %v134
    %v787 = vunpack.c.h.b16 %v134
    %v788 = vunpack.c.l.b16 %v135
    %v789 = vunpack.c.h.b16 %v135
    %v790 = vunpack.c.l.b16 %v136
    %v791 = vunpack.c.h.b16 %v136
    %v792 = vunpack.c.l.b16 %v137
    %v793 = vunpack.c.h.b16 %v137
    %v794 = vunpack.c.l.b16 %v138
    %v795 = vunpack.c.h.b16 %v138
    %v796 = vunpack.c.l.b16 %v139
    %v797 = vunpack.c.h.b16 %v139
    %v798 = vunpack.c.l.b16 %v140
    %v799 = vunpack.c.h.b16 %v140
    %v800 = vunpack.c.l.b16 %v141
    %v801 = vunpack.c.h.b16 %v141
    %v802 = vunpack.c.l.b16 %v142
    %v803 = vunpack.c.h.b16 %v142
    %v804 = vunpack.c.l.b16 %v143
    %v805 = vunpack.c.h.b16 %v143
    %v806 = vunpack.c.l.b16 %v144
    %v807 = vunpack.c.h.b16 %v144
    %v808 = vunpack.c.l.b16 %v145
    %v809 = vunpack.c.h.b16 %v145
    %v810 = vunpack.c.l.b16 %v146
    %v811 = vunpack.c.h.b16 %v146
    %v812 = vunpack.c.l.b16 %v147
    %v813 = vunpack.c.h.b16 %v147
    %v814 = vunpack.c.l.b16 %v148
    %v815 = vunpack.c.h.b16 %v148
    %v816 = vunpack.c.l.b16 %v149
    %v817 = vunpack.c.h.b16 %v149
    %v818 = vunpack.c.l.b16 %v150
    %v819 = vunpack.c.h.b16 %v150
    %v820 = vunpack.c.l.b16 %v151
    %v821 = vunpack.c.h.b16 %v151
    %v822 = vunpack.c.l.b16 %v152
    %v823 = vunpack.c.h.b16 %v152
    %v824 = vunpack.c.l.b16 %v153
    %v825 = vunpack.c.h.b16 %v153
    %v826 = vunpack.c.l.b16 %v154
    %v827 = vunpack.c.h.b16 %v154
    %v828 = vunpack.c.l.b16 %v155
    %v829 = vunpack.c.h.b16 %v155
    %v830 = vunpack.c.l.b16 %v156
    %v831 = vunpack.c.h.b16 %v156
    %v832 = vunpack.c.l.b16 %v157
    %v833 = vunpack.c.h.b16 %v157
    %v834 = vunpack.c.l.b16 %v158
    %v835 = vunpack.c.h.b16 %v158
    %v836 = vunpack.c.l.b16 %v159
    %v837 = vunpack.c.h.b16 %v159
    %v838 = vunpack.c.l.b16 %v160
    %v839 = vunpack.c.h.b16 %v160
    %v840 = vunpack.c.l.b16 %v161
    %v841 = vunpack.c.h.b16 %v161
    %v842 = vunpack.c.l.b16 %v162
    %v843 = vunpack.c.h.b16 %v162
    %v844 = vunpack.c.l.b16 %v163
    %v845 = vunpack.c.h.b16 %v163
    %v846 = vunpack.c.l.b16 %v164
    %v847 = vunpack.c.h.b16 %v164
    %v848 = vunpack.c.l.b16 %v165
    %v849 = vunpack.c.h.b16 %v165
    %v850 = vunpack.c.l.b16 %v166
    %v851 = vunpack.c.h.b16 %v166
    %v852 = vunpack.c.l.b16 %v167
    %v853 = vunpack.c.h.b16 %v167
    %v854 = vunpack.c.l.b16 %v168
    %v855 = vunpack.c.h.b16 %v168
    %v856 = vunpack.c.l.b16 %v169
    %v857 = vunpack.c.h.b16 %v169
    %v858 = vunpack.c.l.b16 %v170
    %v859 = vunpack.c.h.b16 %v170
    %v860 = vunpack.c.l.b16 %v171
    %v861 = vunpack.c.h.b16 %v171
    %v862 = vunpack.c.l.b16 %v172
    %v863 = vunpack.c.h.b16 %v172
    %v864 = vunpack.c.l.b16 %v173
    %v865 = vunpack.c.h.b16 %v173
    %v866 = vunpack.c.l.b16 %v174
    %v867 = vunpack.c.h.b16 %v174
    %v868 = vunpack.c.l.b16 %v175
    %v869 = vunpack.c.h.b16 %v175
    %v870 = vunpack.c.l.b16 %v176
    %v871 = vunpack.c.h.b16 %v176
    %v872 = vunpack.c.l.b16 %v177
    %v873 = vunpack.c.h.b16 %v177
    %v874 = vunpack.c.l.b16 %v178
    %v875 = vunpack.c.h.b16 %v178
    %v876 = vunpack.c.l.b16 %v179
    %v877 = vunpack.c.h.b16 %v179
    %v878 = vunpack.c.l.b16 %v180
    %v879 = vunpack.c.h.b16 %v180
    %v880 = vunpack.c.l.b16 %v181
    %v881 = vunpack.c.h.b16 %v181
    %v882 = vunpack.c.l.b16 %v182
    %v883 = vunpack.c.h.b16 %v182
    %v884 = vunpack.c.l.b16 %v183
    %v885 = vunpack.c.h.b16 %v183
    %v886 = vunpack.c.l.b16 %v184
    %v887 = vunpack.c.h.b16 %v184
    %v888 = vunpack.c.l.b16 %v185
    %v889 = vunpack.c.h.b16 %v185
    %v890 = vunpack.c.l.b16 %v186
    %v891 = vunpack.c.h.b16 %v186
    %v892 = vunpack.c.l.b16 %v187
    %v893 = vunpack.c.h.b16 %v187
    %v894 = vunpack.c.l.b16 %v188
    %v895 = vunpack.c.h.b16 %v188
    %v896 = vunpack.c.l.b16 %v189
    %v897 = vunpack.c.h.b16 %v189
    %v898 = vunpack.c.l.b16 %v190
    %v899 = vunpack.c.h.b16 %v190
    %v900 = vunpack.c.l.b16 %v191
    %v901 = vunpack.c.h.b16 %v191
    %v902 = vunpack.c.l.b16 %v192
    %v903 = vunpack.c.h.b16 %v192
    %v904 = vunpack.c.l.b16 %v193
    %v905 = vunpack.c.h.b16 %v193
    %v906 = vunpack.c.l.b16 %v194
    %v907 = vunpack.c.h.b16 %v194
    %v908 = vunpack.c.l.b16 %v195
    %v909 = vunpack.c.h.b16 %v195
    %v910 = vunpack.c.l.b16 %v196
    %v911 = vunpack.c.h.b16 %v196
    %v912 = vunpack.c.l.b16 %v197
    %v913 = vunpack.c.h.b16 %v197
    %v914 = vunpack.c.l.b16 %v198
    %v915 = vunpack.c.h.b16 %v198
    %v916 = vunpack.c.l.b16 %v199
    %v917 = vunpack.c.h.b16 %v199
    %v918 = vunpack.c.l.b16 %v200
    %v919 = vunpack.c.h.b16 %v200
    %v920 = vunpack.c.l.b16 %v201
    %v921 = vunpack.c.h.b16 %v201
    %v922 = vunpack.c.l.b16 %v202
    %v923 = vunpack.c.h.b16 %v202
    %v924 = vunpack.c.l.b16 %v203
    %v925 = vunpack.c.h.b16 %v203
    %v926 = vunpack.c.l.b16 %v204
    %v927 = vunpack.c.h.b16 %v204
    %v928 = vunpack.c.l.b16 %v205
    %v929 = vunpack.c.h.b16 %v205
    %v930 = vunpack.c.l.b16 %v206
    %v931 = vunpack.c.h.b16 %v206
    %v932 = vunpack.c.l.b16 %v207
    %v933 = vunpack.c.h.b16 %v207
    %v934 = vunpack.c.l.b16 %v208
    %v935 = vunpack.c.h.b16 %v208
    %v936 = vunpack.c.l.b16 %v209
    %v937 = vunpack.c.h.b16 %v209
    %v938 = vunpack.c.l.b16 %v210
    %v939 = vunpack.c.h.b16 %v210
    %v940 = vunpack.c.l.b16 %v211
    %v941 = vunpack.c.h.b16 %v211
    %v942 = vunpack.c.l.b16 %v212
    %v943 = vunpack.c.h.b16 %v212
    %v944 = vunpack.c.l.b16 %v213
    %v945 = vunpack.c.h.b16 %v213
    %v946 = vunpack.c.l.b16 %v214
    %v947 = vunpack.c.h.b16 %v214
    %v948 = vunpack.c.l.b16 %v215
    %v949 = vunpack.c.h.b16 %v215
    %v950 = vunpack.c.l.b16 %v216
    %v951 = vunpack.c.h.b16 %v216
    %v952 = vunpack.c.l.b16 %v217
    %v953 = vunpack.c.h.b16 %v217
    %v954 = vunpack.c.l.b16 %v218
    %v955 = vunpack.c.h.b16 %v218
    %v956 = vunpack.c.l.b16 %v219
    %v957 = vunpack.c.h.b16 %v219
    %v958 = vunpack.c.l.b16 %v220
    %v959 = vunpack.c.h.b16 %v220
    %v960 = vunpack.c.l.b16 %v221
    %v961 = vunpack.c.h.b16 %v221
    %v962 = vunpack.c.l.b16 %v222
    %v963 = vunpack.c.h.b16 %v222
    %v964 = vunpack.c.l.b16 %v223
    %v965 = vunpack.c.h.b16 %v223
    %v966 = vunpack.c.l.b16 %v224
    %v967 = vunpack.c.h.b16 %v224
    %v968 = vunpack.c.l.b16 %v225
    %v969 = vunpack.c.h.b16 %v225
    %v970 = vunpack.c.l.b16 %v226
    %v971 = vunpack.c.h.b16 %v226
    %v972 = vunpack.c.l.b16 %v227
    %v973 = vunpack.c.h.b16 %v227
    %v974 = vunpack.c.l.b16 %v228
    %v975 = vunpack.c.h.b16 %v228
    %v976 = vunpack.c.l.b16 %v229
    %v977 = vunpack.c.h.b16 %v229
    %v978 = vunpack.c.l.b16 %v230
    %v979 = vunpack.c.h.b16 %v230
    %v980 = vunpack.c.l.b16 %v231
    %v981 = vunpack.c.h.b16 %v231
    %v982 = vunpack.c.l.b16 %v232
    %v983 = vunpack.c.h.b16 %v232
    %v984 = vunpack.c.l.b16 %v233
    %v985 = vunpack.c.h.b16 %v233
    %v986 = vunpack.c.l.b16 %v234
    %v987 = vunpack.c.h.b16 %v234
    %v988 = vunpack.c.l.b16 %v235
    %v989 = vunpack.c.h.b16 %v235
    %v990 = vunpack.c.l.b16 %v236
    %v991 = vunpack.c.h.b16 %v236
    %v992 = vunpack.c.l.b16 %v237
    %v993 = vunpack.c.h.b16 %v237
    %v994 = vunpack.c.l.b16 %v238
    %v995 = vunpack.c.h.b16 %v238
    %v996 = vunpack.c.l.b16 %v239
    %v997 = vunpack.c.h.b16 %v239
    %v998 = vunpack.c.l.b16 %v240
    %v999 = vunpack.c.h.b16 %v240
    %v1000 = vunpack.c.l.b16 %v241
    %v1001 = vunpack.c.h.b16 %v241
    %v1002 = vunpack.c.l.b16 %v242
    %v1003 = vunpack.c.h.b16 %v242
    %v1004 = vunpack.c.l.b16 %v243
    %v1005 = vunpack.c.h.b16 %v243
    %v1006 = vunpack.c.l.b16 %v244
    %v1007 = vunpack.c.h.b16 %v244
    %v1008 = vunpack.c.l.b16 %v245
    %v1009 = vunpack.c.h.b16 %v245
    %v1010 = vunpack.c.l.b16 %v246
    %v1011 = vunpack.c.h.b16 %v246
    %v1012 = vunpack.c.l.b16 %v247
    %v1013 = vunpack.c.h.b16 %v247
    %v1014 = vunpack.c.l.b16 %v248
    %v1015 = vunpack.c.h.b16 %v248
    %v1016 = vunpack.c.l.b16 %v249
    %v1017 = vunpack.c.h.b16 %v249
    %v1018 = vunpack.c.l.b16 %v250
    %v1019 = vunpack.c.h.b16 %v250
    %v1020 = vunpack.c.l.b16 %v251
    %v1021 = vunpack.c.h.b16 %v251
    %v1022 = vunpack.c.l.b16 %v252
    %v1023 = vunpack.c.h.b16 %v252
    %v1024 = vunpack.c.l.b16 %v253
    %v1025 = vunpack.c.h.b16 %v253
    %v1026 = vunpack.c.l.b16 %v254
    %v1027 = vunpack.c.h.b16 %v254
    %v1028 = vunpack.c.l.b16 %v255
    %v1029 = vunpack.c.h.b16 %v255
    %v1030 = vunpack.c.l.b16 %v256
    %v1031 = vunpack.c.h.b16 %v256
    %v1032 = vunpack.c.l.b16 %v257
    %v1033 = vunpack.c.h.b16 %v257
    %v1034 = vunpack.c.l.b16 %v258
    %v1035 = vunpack.c.h.b16 %v258
    %v1036 = vunpack.c.l.b16 %v259
    %v1037 = vunpack.c.h.b16 %v259
    %v1038 = vunpack.c.l.b16 %v260
    %v1039 = vunpack.c.h.b16 %v260
    %v1040 = vunpack.c.l.b16 %v261
    %v1041 = vunpack.c.h.b16 %v261
    %v1042 = vunpack.c.l.b16 %v262
    %v1043 = vunpack.c.h.b16 %v262
    %v1044 = vunpack.c.l.b16 %v263
    %v1045 = vunpack.c.h.b16 %v263
    %v1046 = vunpack.c.l.b16 %v264
    %v1047 = vunpack.c.h.b16 %v264
    %v1048 = vunpack.c.l.b16 %v265
    %v1049 = vunpack.c.h.b16 %v265
    %v1050 = vunpack.c.l.b16 %v266
    %v1051 = vunpack.c.h.b16 %v266
    %v1052 = vunpack.c.l.b16 %v267
    %v1053 = vunpack.c.h.b16 %v267
    %v1054 = vunpack.c.l.b16 %v268
    %v1055 = vunpack.c.h.b16 %v268
    %v1056 = vunpack.c.l.b16 %v269
    %v1057 = vunpack.c.h.b16 %v269
    %v1058 = vunpack.c.l.b16 %v270
    %v1059 = vunpack.c.h.b16 %v270
    %v1060 = vunpack.c.l.b16 %v271
    %v1061 = vunpack.c.h.b16 %v271
    %v1062 = vunpack.c.l.b16 %v272
    %v1063 = vunpack.c.h.b16 %v272
    %v1064 = vunpack.c.l.b16 %v273
    %v1065 = vunpack.c.h.b16 %v273
    %v1066 = vunpack.c.l.b16 %v274
    %v1067 = vunpack.c.h.b16 %v274
    %v1068 = vunpack.c.l.b16 %v275
    %v1069 = vunpack.c.h.b16 %v275
    %v1070 = vunpack.c.l.b16 %v276
    %v1071 = vunpack.c.h.b16 %v276
    %v1072 = vunpack.c.l.b16 %v277
    %v1073 = vunpack.c.h.b16 %v277
    %v1074 = vunpack.c.l.b16 %v278
    %v1075 = vunpack.c.h.b16 %v278
    %v1076 = vunpack.c.l.b16 %v279
    %v1077 = vunpack.c.h.b16 %v279
    %v1078 = vunpack.c.l.b16 %v280
    %v1079 = vunpack.c.h.b16 %v280
    %v1080 = vunpack.c.l.b16 %v281
    %v1081 = vunpack.c.h.b16 %v281
    %v1082 = vunpack.c.l.b16 %v282
    %v1083 = vunpack.c.h.b16 %v282
    %v1084 = vunpack.c.l.b16 %v283
    %v1085 = vunpack.c.h.b16 %v283
    %v1086 = vunpack.c.l.b16 %v284
    %v1087 = vunpack.c.h.b16 %v284
    %v1088 = vunpack.c.l.b16 %v285
    %v1089 = vunpack.c.h.b16 %v285
    %v1090 = vunpack.c.l.b16 %v286
    %v1091 = vunpack.c.h.b16 %v286
    %v1092 = vunpack.c.l.b16 %v287
    %v1093 = vunpack.c.h.b16 %v287
    %v1094 = vunpack.c.l.b16 %v288
    %v1095 = vunpack.c.h.b16 %v288
    %v1096 = vunpack.c.l.b16 %v289
    %v1097 = vunpack.c.h.b16 %v289
    %v1098 = vunpack.c.l.b16 %v290
    %v1099 = vunpack.c.h.b16 %v290
    %v1100 = vunpack.c.l.b16 %v291
    %v1101 = vunpack.c.h.b16 %v291
    %v1102 = vunpack.c.l.b16 %v292
    %v1103 = vunpack.c.h.b16 %v292
    %v1104 = vunpack.c.l.b16 %v293
    %v1105 = vunpack.c.h.b16 %v293
    %v1106 = vunpack.c.l.b16 %v294
    %v1107 = vunpack.c.h.b16 %v294
    %v1108 = vunpack.c.l.b16 %v295
    %v1109 = vunpack.c.h.b16 %v295
    %v1110 = vunpack.c.l.b16 %v296
    %v1111 = vunpack.c.h.b16 %v296
    %v1112 = vunpack.c.l.b16 %v297
    %v1113 = vunpack.c.h.b16 %v297
    %v1114 = vunpack.c.l.b16 %v298
    %v1115 = vunpack.c.h.b16 %v298
    %v1116 = vunpack.c.l.b16 %v299
    %v1117 = vunpack.c.h.b16 %v299
    %v1118 = vunpack.c.l.b16 %v300
    %v1119 = vunpack.c.h.b16 %v300
    %v1120 = vunpack.c.l.b16 %v301
    %v1121 = vunpack.c.h.b16 %v301
    %v1122 = vunpack.c.l.b16 %v302
    %v1123 = vunpack.c.h.b16 %v302
    %v1124 = vunpack.c.l.b16 %v303
    %v1125 = vunpack.c.h.b16 %v303
    %v1126 = vunpack.c.l.b16 %v304
    %v1127 = vunpack.c.h.b16 %v304
    %v1128 = vunpack.c.l.b16 %v305
    %v1129 = vunpack.c.h.b16 %v305
    %v1130 = vunpack.c.l.b16 %v306
    %v1131 = vunpack.c.h.b16 %v306
    %v1132 = vunpack.c.l.b16 %v307
    %v1133 = vunpack.c.h.b16 %v307
    %v1134 = vunpack.c.l.b16 %v308
    %v1135 = vunpack.c.h.b16 %v308
    %v1136 = vunpack.c.l.b16 %v309
    %v1137 = vunpack.c.h.b16 %v309
    %v1138 = vunpack.c.l.b16 %v310
    %v1139 = vunpack.c.h.b16 %v310
    %v1140 = vunpack.c.l.b16 %v311
    %v1141 = vunpack.c.h.b16 %v311
    %v1142 = vunpack.c.l.b16 %v312
    %v1143 = vunpack.c.h.b16 %v312
    %v1144 = vunpack.c.l.b16 %v313
    %v1145 = vunpack.c.h.b16 %v313
    %v1146 = vunpack.c.l.b16 %v314
    %v1147 = vunpack.c.h.b16 %v314
    %v1148 = vunpack.c.l.b16 %v315
    %v1149 = vunpack.c.h.b16 %v315
    %v1150 = vunpack.c.l.b16 %v316
    %v1151 = vunpack.c.h.b16 %v316
    %v1152 = vunpack.c.l.b16 %v317
    %v1153 = vunpack.c.h.b16 %v317
    %v1154 = vunpack.c.l.b16 %v318
    %v1155 = vunpack.c.h.b16 %v318
    %v1156 = vunpack.c.l.b16 %v319
    %v1157 = vunpack.c.h.b16 %v319
    %v1158 = vunpack.c.l.b16 %v320
    %v1159 = vunpack.c.h.b16 %v320
    %v1160 = vunpack.c.l.b16 %v321
    %v1161 = vunpack.c.h.b16 %v321
    %v1162 = vunpack.c.l.b16 %v322
    %v1163 = vunpack.c.h.b16 %v322
    %v1164 = vunpack.c.l.b16 %v323
    %v1165 = vunpack.c.h.b16 %v323
    %v1166 = vunpack.c.l.b16 %v324
    %v1167 = vunpack.c.h.b16 %v324
    %v1168 = vunpack.c.l.b16 %v325
    %v1169 = vunpack.c.h.b16 %v325
    %v1170 = vunpack.c.l.b16 %v326
    %v1171 = vunpack.c.h.b16 %v326
    %v1172 = vunpack.c.l.b16 %v327
    %v1173 = vunpack.c.h.b16 %v327
    %v1174 = vunpack.c.l.b16 %v328
    %v1175 = vunpack.c.h.b16 %v328
    %v1176 = vunpack.c.l.b16 %v329
    %v1177 = vunpack.c.h.b16 %v329
    %v1178 = vunpack.c.l.b16 %v330
    %v1179 = vunpack.c.h.b16 %v330
    %v1180 = vunpack.c.l.b16 %v331
    %v1181 = vunpack.c.h.b16 %v331
    %v1182 = vunpack.c.l.b16 %v332
    %v1183 = vunpack.c.h.b16 %v332
    %v1184 = vunpack.c.l.b16 %v333
    %v1185 = vunpack.c.h.b16 %v333
    %v1186 = vunpack.c.l.b16 %v334
    %v1187 = vunpack.c.h.b16 %v334
    %v1188 = vunpack.c.l.b16 %v335
    %v1189 = vunpack.c.h.b16 %v335
    %v1190 = vunpack.c.l.b16 %v336
    %v1191 = vunpack.c.h.b16 %v336
    %v1192 = vunpack.c.l.b16 %v337
    %v1193 = vunpack.c.h.b16 %v337
    %v1194 = vunpack.c.l.b16 %v338
    %v1195 = vunpack.c.h.b16 %v338
    %v1196 = vunpack.c.l.b16 %v339
    %v1197 = vunpack.c.h.b16 %v339
    %v1198 = vunpack.c.l.b16 %v340
    %v1199 = vunpack.c.h.b16 %v340
    %v1200 = vunpack.c.l.b16 %v341
    %v1201 = vunpack.c.h.b16 %v341
    %v1202 = vunpack.c.l.b16 %v342
    %v1203 = vunpack.c.h.b16 %v342
    %v1204 = vunpack.c.l.b16 %v343
    %v1205 = vunpack.c.h.b16 %v343
    %v1206 = vunpack.c.l.b16 %v344
    %v1207 = vunpack.c.h.b16 %v344
    %v1208 = vunpack.c.l.b16 %v345
    %v1209 = vunpack.c.h.b16 %v345
    %v1210 = vunpack.c.l.b16 %v346
    %v1211 = vunpack.c.h.b16 %v346
    %v1212 = vunpack.c.l.b16 %v347
    %v1213 = vunpack.c.h.b16 %v347
    %v1214 = vunpack.c.l.b16 %v348
    %v1215 = vunpack.c.h.b16 %v348
    %v1216 = vunpack.c.l.b16 %v349
    %v1217 = vunpack.c.h.b16 %v349
    %v1218 = vunpack.c.l.b16 %v350
    %v1219 = vunpack.c.h.b16 %v350
    %v1220 = vunpack.c.l.b16 %v351
    %v1221 = vunpack.c.h.b16 %v351
    %v1222 = vunpack.c.l.b16 %v352
    %v1223 = vunpack.c.h.b16 %v352
    %v1224 = vunpack.c.l.b16 %v353
    %v1225 = vunpack.c.h.b16 %v353
    %v1226 = vunpack.c.l.b16 %v354
    %v1227 = vunpack.c.h.b16 %v354
    %v1228 = vunpack.c.l.b16 %v355
    %v1229 = vunpack.c.h.b16 %v355
    %v1230 = vunpack.c.l.b16 %v356
    %v1231 = vunpack.c.h.b16 %v356
    %v1232 = vunpack.c.l.b16 %v357
    %v1233 = vunpack.c.h.b16 %v357
    %v1234 = vunpack.c.l.b16 %v358
    %v1235 = vunpack.c.h.b16 %v358
    %v1236 = vunpack.c.l.b16 %v359
    %v1237 = vunpack.c.h.b16 %v359
    %v1238 = vunpack.c.l.b16 %v360
    %v1239 = vunpack.c.h.b16 %v360
    %v1240 = vunpack.c.l.b16 %v361
    %v1241 = vunpack.c.h.b16 %v361
    %v1242 = vunpack.c.l.b16 %v362
    %v1243 = vunpack.c.h.b16 %v362
    %v1244 = vunpack.c.l.b16 %v363
    %v1245 = vunpack.c.h.b16 %v363
    %v1246 = vunpack.c.l.b16 %v364
    %v1247 = vunpack.c.h.b16 %v364
    %v1248 = vunpack.c.l.b16 %v365
    %v1249 = vunpack.c.h.b16 %v365
    %v1250 = vunpack.c.l.b16 %v366
    %v1251 = vunpack.c.h.b16 %v366
    %v1252 = vunpack.c.l.b16 %v367
    %v1253 = vunpack.c.h.b16 %v367
    %v1254 = vunpack.c.l.b16 %v368
    %v1255 = vunpack.c.h.b16 %v368
    %v1256 = vunpack.c.l.b16 %v369
    %v1257 = vunpack.c.h.b16 %v369
    %v1258 = vunpack.c.l.b16 %v370
    %v1259 = vunpack.c.h.b16 %v370
    %v1260 = vunpack.c.l.b16 %v371
    %v1261 = vunpack.c.h.b16 %v371
    %v1262 = vunpack.c.l.b16 %v372
    %v1263 = vunpack.c.h.b16 %v372
    %v1264 = vunpack.c.l.b16 %v373
    %v1265 = vunpack.c.h.b16 %v373
    %v1266 = vunpack.c.l.b16 %v374
    %v1267 = vunpack.c.h.b16 %v374
    %v1268 = vunpack.c.l.b16 %v375
    %v1269 = vunpack.c.h.b16 %v375
    %v1270 = vunpack.c.l.b16 %v376
    %v1271 = vunpack.c.h.b16 %v376
    %v1272 = vunpack.c.l.b16 %v377
    %v1273 = vunpack.c.h.b16 %v377
    %v1274 = vpack.c.b16 %v704, %v698
    %v1275 = vpack.c.b16 %v705, %v699
    %v1276 = vpack.c.b16 %v706, %v700
    %v1277 = vpack.c.b16 %v707, %v701
    %v1278 = vpack.c.b16 %v708, %v702
    %v1279 = vpack.c.b16 %v709, %v703
    %v1280 = vpack.c.b16 %v716, %v710
    %v1281 = vpack.c.b16 %v717, %v711
    %v1282 = vpack.c.b16 %v718, %v712
    %v1283 = vpack.c.b16 %v719, %v713
    %v1284 = vpack.c.b16 %v720, %v714
    %v1285 = vpack.c.b16 %v721, %v715
    %v1286 = vpack.c.b16 %v728, %v722
    %v1287 = vpack.c.b16 %v729, %v723
    %v1288 = vpack.c.b16 %v730, %v724
    %v1289 = vpack.c.b16 %v731, %v725
    %v1290 = vpack.c.b16 %v732, %v726
    %v1291 = vpack.c.b16 %v733, %v727
    %v1292 = vpack.c.b16 %v740, %v734
    %v1293 = vpack.c.b16 %v741, %v735
    %v1294 = vpack.c.b16 %v742, %v736
    %v1295 = vpack.c.b16 %v743, %v737
    %v1296 = vpack.c.b16 %v744, %v738
    %v1297 = vpack.c.b16 %v745, %v739
    %v1298 = vpack.c.b16 %v752, %v746
    %v1299 = vpack.c.b16 %v753, %v747
    %v1300 = vpack.c.b16 %v754, %v748
    %v1301 = vpack.c.b16 %v755, %v749
    %v1302 = vpack.c.b16 %v756, %v750
    %v1303 = vpack.c.b16 %v757, %v751
    %v1304 = vpack.c.b16 %v764, %v758
    %v1305 = vpack.c.b16 %v765, %v759
    %v1306 = vpack.c.b16 %v766, %v760
    %v1307 = vpack.c.b16 %v767, %v761
    %v1308 = vpack.c.b16 %v768, %v762
    %v1309 = vpack.c.b16 %v769, %v763
    %v1310 = vpack.c.b16 %v776, %v770
    %v1311 = vpack.c.b16 %v777, %v771
    %v1312 = vpack.c.b16 %v778, %v772
    %v1313 = vpack.c.b16 %v779, %v773
    %v1314 = vpack.c.b16 %v780, %v774
    %v1315 = vpack.c.b16 %v781, %v775
    %v1316 = vpack.c.b16 %v788, %v782
    %v1317 = vpack.c.b16 %v789, %v783
    %v1318 = vpack.c.b16 %v790, %v784
    %v1319 = vpack.c.b16 %v791, %v785
    %v1320 = vpack.c.b16 %v792, %v786
    %v1321 = vpack.c.b16 %v793, %v787
    %v1322 = vpack.c.b16 %v800, %v794
    %v1323 = vpack.c.b16 %v801, %v795
    %v1324 = vpack.c.b16 %v802, %v796
    %v1325 = vpack.c.b16 %v803, %v797
    %v1326 = vpack.c.b16 %v804, %v798
    %v1327 = vpack.c.b16 %v805, %v799
    %v1328 = vpack.c.b16 %v812, %v806
    %v1329 = vpack.c.b16 %v813, %v807
    %v1330 = vpack.c.b16 %v814, %v808
    %v1331 = vpack.c.b16 %v815, %v809
    %v1332 = vpack.c.b16 %v816, %v810
    %v1333 = vpack.c.b16 %v817, %v811
    %v1334 = vpack.c.b16 %v824, %v818
    %v1335 = vpack.c.b16 %v825, %v819
    %v1336 = vpack.c.b16 %v826, %v820
    %v1337 = vpack.c.b16 %v827, %v821
    %v1338 = vpack.c.b16 %v828, %v822
    %v1339 = vpack.c.b16 %v829, %v823
    %v1340 = vpack.c.b16 %v836, %v830
    %v1341 = vpack.c.b16 %v837, %v831
    %v1342 = vpack.c.b16 %v838, %v832
    %v1343 = vpack.c.b16 %v839, %v833
    %v1344 = vpack.c.b16 %v840, %v834
    %v1345 = vpack.c.b16 %v841, %v835
    %v1346 = vpack.c.b16 %v848, %v842
    %v1347 = vpack.c.b16 %v849, %v843
    %v1348 = vpack.c.b16 %v850, %v844
    %v1349 = vpack.c.b16 %v851, %v845
    %v1350 = vpack.c.b16 %v852, %v846
    %v1351 = vpack.c.b16 %v853, %v847
    %v1352 = vpack.c.b16 %v860, %v854
    %v1353 = vpack.c.b16 %v861, %v855
    %v1354 = vpack.c.b16 %v862, %v856
    %v1355 = vpack.c.b16 %v863, %v857
    %v1356 = vpack.c.b16 %v864, %v858
    %v1357 = vpack.c.b16 %v865, %v859
    %v1358 = vpack.c.b16 %v872, %v866
    %v1359 = vpack.c.b16 %v873, %v867
    %v1360 = vpack.c.b16 %v874, %v868
    %v1361 = vpack.c.b16 %v875, %v869
    %v1362 = vpack.c.b16 %v876, %v870
    %v1363 = vpack.c.b16 %v877, %v871
    %v1364 = vpack.c.b16 %v884, %v878
    %v1365 = vpack.c.b16 %v885, %v879
    %v1366 = vpack.c.b16 %v886, %v880
    %v1367 = vpack.c.b16 %v887, %v881
    %v1368 = vpack.c.b16 %v888, %v882
    %v1369 = vpack.c.b16 %v889, %v883
    %v1370 = vpack.c.b16 %v896, %v890
    %v1371 = vpack.c.b16 %v897, %v891
    %v1372 = vpack.c.b16 %v898, %v892
    %v1373 = vpack.c.b16 %v899, %v893
    %v1374 = vpack.c.b16 %v900, %v894
    %v1375 = vpack.c.b16 %v901, %v895
    %v1376 = vpack.c.b16 %v908, %v902
    %v1377 = vpack.c.b16 %v909, %v903
    %v1378 = vpack.c.b16 %v910, %v904
    %v1379 = vpack.c.b16 %v911, %v905
    %v1380 = vpack.c.b16 %v912, %v906
    %v1381 = vpack.c.b16 %v913, %v907
    %v1382 = vpack.c.b16 %v920, %v914
    %v1383 = vpack.c.b16 %v921, %v915
    %v1384 = vpack.c.b16 %v922, %v916
    %v1385 = vpack.c.b16 %v923, %v917
    %v1386 = vpack.c.b16 %v924, %v918
    %v1387 = vpack.c.b16 %v925, %v919
    %v1388 = vpack.c.b16 %v932, %v926
    %v1389 = vpack.c.b16 %v933, %v927
    %v1390 = vpack.c.b16 %v934, %v928
    %v1391 = vpack.c.b16 %v935, %v929
    %v1392 = vpack.c.b16 %v936, %v930
    %v1393 = vpack.c.b16 %v937, %v931
    %v1394 = vpack.c.b16 %v944, %v938
    %v1395 = vpack.c.b16 %v945, %v939
    %v1396 = vpack.c.b16 %v946, %v940
    %v1397 = vpack.c.b16 %v947, %v941
    %v1398 = vpack.c.b16 %v948, %v942
    %v1399 = vpack.c.b16 %v949, %v943
    %v1400 = vpack.c.b16 %v956, %v950
    %v1401 = vpack.c.b16 %v957, %v951
    %v1402 = vpack.c.b16 %v958, %v952
    %v1403 = vpack.c.b16 %v959, %v953
    %v1404 = vpack.c.b16 %v960, %v954
    %v1405 = vpack.c.b16 %v961, %v955
    %v1406 = vpack.c.b16 %v968, %v962
    %v1407 = vpack.c.b16 %v969, %v963
    %v1408 = vpack.c.b16 %v970, %v964
    %v1409 = vpack.c.b16 %v971, %v965
    %v1410 = vpack.c.b16 %v972, %v966
    %v1411 = vpack.c.b16 %v973, %v967
    %v1412 = vpack.c.b16 %v980, %v974
    %v1413 = vpack.c.b16 %v981, %v975
    %v1414 = vpack.c.b16 %v982, %v976
    %v1415 = vpack.c.b16 %v983, %v977
    %v1416 = vpack.c.b16 %v984, %v978
    %v1417 = vpack.c.b16 %v985, %v979
    %v1418 = vpack.c.b16 %v992, %v986
    %v1419 = vpack.c.b16 %v993, %v987
    %v1420 = vpack.c.b16 %v994, %v988
    %v1421 = vpack.c.b16 %v995, %v989
    %v1422 = vpack.c.b16 %v996, %v990
    %v1423 = vpack.c.b16 %v997, %v991
    %v1424 = vpack.c.b16 %v1004, %v998
    %v1425 = vpack.c.b16 %v1005, %v999
    %v1426 = vpack.c.b16 %v1006, %v1000
    %v1427 = vpack.c.b16 %v1007, %v1001
    %v1428 = vpack.c.b16 %v1008, %v1002
    %v1429 = vpack.c.b16 %v1009, %v1003
    %v1430 = vpack.c.b16 %v1016, %v1010
    %v1431 = vpack.c.b16 %v1017, %v1011
    %v1432 = vpack.c.b16 %v1018, %v1012
    %v1433 = vpack.c.b16 %v1019, %v1013
    %v1434 = vpack.c.b16 %v1020, %v1014
    %v1435 = vpack.c.b16 %v1021, %v1015
    %v1436 = vpack.c.b16 %v1028, %v1022
    %v1437 = vpack.c.b16 %v1029, %v1023
    %v1438 = vpack.c.b16 %v1030, %v1024
    %v1439 = vpack.c.b16 %v1031, %v1025
    %v1440 = vpack.c.b16 %v1032, %v1026
    %v1441 = vpack.c.b16 %v1033, %v1027
    %v1442 = vpack.c.b16 %v1040, %v1034
    %v1443 = vpack.c.b16 %v1041, %v1035
    %v1444 = vpack.c.b16 %v1042, %v1036
    %v1445 = vpack.c.b16 %v1043, %v1037
    %v1446 = vpack.c.b16 %v1044, %v1038
    %v1447 = vpack.c.b16 %v1045, %v1039
    %v1448 = vpack.c.b16 %v1052, %v1046
    %v1449 = vpack.c.b16 %v1053, %v1047
    %v1450 = vpack.c.b16 %v1054, %v1048
    %v1451 = vpack.c.b16 %v1055, %v1049
    %v1452 = vpack.c.b16 %v1056, %v1050
    %v1453 = vpack.c.b16 %v1057, %v1051
    %v1454 = vpack.c.b16 %v1064, %v1058
    %v1455 = vpack.c.b16 %v1065, %v1059
    %v1456 = vpack.c.b16 %v1066, %v1060
    %v1457 = vpack.c.b16 %v1067, %v1061
    %v1458 = vpack.c.b16 %v1068, %v1062
    %v1459 = vpack.c.b16 %v1069, %v1063
    %v1460 = vpack.c.b16 %v1076, %v1070
    %v1461 = vpack.c.b16 %v1077, %v1071
    %v1462 = vpack.c.b16 %v1078, %v1072
    %v1463 = vpack.c.b16 %v1079, %v1073
    %v1464 = vpack.c.b16 %v1080, %v1074
    %v1465 = vpack.c.b16 %v1081, %v1075
    %v1466 = vpack.c.b16 %v1088, %v1082
    %v1467 = vpack.c.b16 %v1089, %v1083
    %v1468 = vpack.c.b16 %v1090, %v1084
    %v1469 = vpack.c.b16 %v1091, %v1085
    %v1470 = vpack.c.b16 %v1092, %v1086
    %v1471 = vpack.c.b16 %v1093, %v1087
    %v1472 = vpack.c.b16 %v1100, %v1094
    %v1473 = vpack.c.b16 %v1101, %v1095
    %v1474 = vpack.c.b16 %v1102, %v1096
    %v1475 = vpack.c.b16 %v1103, %v1097
    %v1476 = vpack.c.b16 %v1104, %v1098
    %v1477 = vpack.c.b16 %v1105, %v1099
    %v1478 = vpack.c.b16 %v1112, %v1106
    %v1479 = vpack.c.b16 %v1113, %v1107
    %v1480 = vpack.c.b16 %v1114, %v1108
    %v1481 = vpack.c.b16 %v1115, %v1109
    %v1482 = vpack.c.b16 %v1116, %v1110
    %v1483 = vpack.c.b16 %v1117, %v1111
    %v1484 = vpack.c.b16 %v1124, %v1118
    %v1485 = vpack.c.b16 %v1125, %v1119
    %v1486 = vpack.c.b16 %v1126, %v1120
    %v1487 = vpack.c.b16 %v1127, %v1121
    %v1488 = vpack.c.b16 %v1128, %v1122
    %v1489 = vpack.c.b16 %v1129, %v1123
    %v1490 = vpack.c.b16 %v1136, %v1130
    %v1491 = vpack.c.b16 %v1137, %v1131
    %v1492 = vpack.c.b16 %v1138, %v1132
    %v1493 = vpack.c.b16 %v1139, %v1133
    %v1494 = vpack.c.b16 %v1140, %v1134
    %v1495 = vpack.c.b16 %v1141, %v1135
    %v1496 = vpack.c.b16 %v1148, %v1142
    %v1497 = vpack.c.b16 %v1149, %v1143
    %v1498 = vpack.c.b16 %v1150, %v1144
    %v1499 = vpack.c.b16 %v1151, %v1145
    %v1500 = vpack.c.b16 %v1152, %v1146
    %v1501 = vpack.c.b16 %v1153, %v1147
    %v1502 = vpack.c.b16 %v1160, %v1154
    %v1503 = vpack.c.b16 %v1161, %v1155
    %v1504 = vpack.c.b16 %v1162, %v1156
    %v1505 = vpack.c.b16 %v1163, %v1157
    %v1506 = vpack.c.b16 %v1164, %v1158
    %v1507 = vpack.c.b16 %v1165, %v1159
    %v1508 = vpack.c.b16 %v1172, %v1166
    %v1509 = vpack.c.b16 %v1173, %v1167
    %v1510 = vpack.c.b16 %v1174, %v1168
    %v1511 = vpack.c.b16 %v1175, %v1169
    %v1512 = vpack.c.b16 %v1176, %v1170
    %v1513 = vpack.c.b16 %v1177, %v1171
    %v1514 = vpack.c.b16 %v1184, %v1178
    %v1515 = vpack.c.b16 %v1185, %v1179
    %v1516 = vpack.c.b16 %v1186, %v1180
    %v1517 = vpack.c.b16 %v1187, %v1181
    %v1518 = vpack.c.b16 %v1188, %v1182
    %v1519 = vpack.c.b16 %v1189, %v1183
    %v1520 = vpack.c.b16 %v1196, %v1190
    %v1521 = vpack.c.b16 %v1197, %v1191
    %v1522 = vpack.c.b16 %v1198, %v1192
    %v1523 = vpack.c.b16 %v1199, %v1193
    %v1524 = vpack.c.b16 %v1200, %v1194
    %v1525 = vpack.c.b16 %v1201, %v1195
    %v1526 = vpack.c.b16 %v1208, %v1202
    %v1527 = vpack.c.b16 %v1209, %v1203
    %v1528 = vpack.c.b16 %v1210, %v1204
    %v1529 = vpack.c.b16 %v1211, %v1205
    %v1530 = vpack.c.b16 %v1212, %v1206
    %v1531 = vpack.c.b16 %v1213, %v1207
    %v1532 = vpack.c.b16 %v1220, %v1214
    %v1533 = vpack.c.b16 %v1221, %v1215
    %v1534 = vpack.c.b16 %v1222, %v1216
    %v1535 = vpack.c.b16 %v1223, %v1217
    %v1536 = vpack.c.b16 %v1224, %v1218
    %v1537 = vpack.c.b16 %v1225, %v1219
    %v1538 = vpack.c.b16 %v1232, %v1226
    %v1539 = vpack.c.b16 %v1233, %v1227
    %v1540 = vpack.c.b16 %v1234, %v1228
    %v1541 = vpack.c.b16 %v1235, %v1229
    %v1542 = vpack.c.b16 %v1236, %v1230
    %v1543 = vpack.c.b16 %v1237, %v1231
    %v1544 = vpack.c.b16 %v1244, %v1238
    %v1545 = vpack.c.b16 %v1245, %v1239
    %v1546 = vpack.c.b16 %v1246, %v1240
    %v1547 = vpack.c.b16 %v1247, %v1241
    %v1548 = vpack.c.b16 %v1248, %v1242
    %v1549 = vpack.c.b16 %v1249, %v1243
    %v1550 = vpack.c.b16 %v1256, %v1250
    %v1551 = vpack.c.b16 %v1257, %v1251
    %v1552 = vpack.c.b16 %v1258, %v1252
    %v1553 = vpack.c.b16 %v1259, %v1253
    %v1554 = vpack.c.b16 %v1260, %v1254
    %v1555 = vpack.c.b16 %v1261, %v1255
    %v1556 = vpack.c.b16 %v1268, %v1262
    %v1557 = vpack.c.b16 %v1269, %v1263
    %v1558 = vpack.c.b16 %v1270, %v1264
    %v1559 = vpack.c.b16 %v1271, %v1265
    %v1560 = vpack.c.b16 %v1272, %v1266
    %v1561 = vpack.c.b16 %v1273, %v1267
    %1850 = vmatprep.subr.bf16.mxu0 %v1275
    %1851 = vmatpush1.bf16.msra.mxu0 %v1274
    %1852 = vmatprep.subr.bf16.mxu0 %v1281
    %1853 = vmatpush1.bf16.msra.mxu0 %v1280
    %1854 = vmatprep.subr.bf16.mxu0 %v1287
    %1855 = vmatpush1.bf16.msra.mxu0 %v1286
    %1856 = vmatprep.subr.bf16.mxu0 %v1293
    %1857 = vmatpush1.bf16.msra.mxu0 %v1292
    %1858 = vmatprep.subr.bf16.mxu0 %v1299
    %1859 = vmatpush1.bf16.msra.mxu0 %v1298
    %1860 = vmatprep.subr.bf16.mxu0 %v1305
    %1861 = vmatpush1.bf16.msra.mxu0 %v1304
    %1862 = vmatprep.subr.bf16.mxu0 %v1311
    %1863 = vmatpush1.bf16.msra.mxu0 %v1310
    %1864 = vmatprep.subr.bf16.mxu0 %v1317
    %1865 = vmatpush1.bf16.msra.mxu0 %v1316
    %1866 = vmatprep.subr.bf16.mxu0 %v1323
    %1867 = vmatpush1.bf16.msra.mxu0 %v1322
    %1868 = vmatprep.subr.bf16.mxu0 %v1329
    %1869 = vmatpush1.bf16.msra.mxu0 %v1328
    %1870 = vmatprep.subr.bf16.mxu0 %v1335
    %1871 = vmatpush1.bf16.msra.mxu0 %v1334
    %1872 = vmatprep.subr.bf16.mxu0 %v1341
    %1873 = vmatpush1.bf16.msra.mxu0 %v1340
    %1874 = vmatprep.subr.bf16.mxu0 %v1347
    %1875 = vmatpush1.bf16.msra.mxu0 %v1346
    %1876 = vmatprep.subr.bf16.mxu0 %v1353
    %1877 = vmatpush1.bf16.msra.mxu0 %v1352
    %1878 = vmatprep.subr.bf16.mxu0 %v1359
    %1879 = vmatpush1.bf16.msra.mxu0 %v1358
    %1880 = vmatprep.subr.bf16.mxu0 %v1365
    %1881 = vmatpush1.bf16.msra.mxu0 %v1364
    %1882 = vmatprep.mubr.bf16.mxu0 %v79
    %1883 = vmatmul.mubr.bf16.gmra.mrb[0].mxu0 %v78
    %v1884 = vpop.f32.mrb[0].mxu0
    %v1885 = vadd.f32 %v383, %v1884
    %v1886 = vpop.f32.mrb[0].mxu0
    %v1887 = vadd.f32 %v387, %v1886
    %v1888 = vpop.f32.mrb[0].mxu0
    %v1889 = vadd.f32 %v383, %v1888
    %v1890 = vpop.f32.mrb[0].mxu0
    %v1891 = vadd.f32 %v387, %v1890
    %1892 = vmatprep.mubr.bf16.mxu0 %v85
    %1893 = vmatmul.mubr.bf16.gmra.mrb[0].mxu0 %v84
    %v1894 = vpop.f32.mrb[0].mxu0
    %v1895 = vadd.f32 %v383, %v1894
    %v1896 = vpop.f32.mrb[0].mxu0
    %v1897 = vadd.f32 %v387, %v1896
    %v1898 = vpop.f32.mrb[0].mxu0
    %v1899 = vadd.f32 %v383, %v1898
    %v1900 = vpop.f32.mrb[0].mxu0
    %v1901 = vadd.f32 %v387, %v1900
    %1902 = vdwg.mxu0
    %1903 = vmatprep.subr.bf16.mxu0 %v1371
    %1904 = vmatpush1.bf16.msra.mxu0 %v1370
    %1905 = vmatprep.subr.bf16.mxu0 %v1377
    %1906 = vmatpush1.bf16.msra.mxu0 %v1376
    %1907 = vmatprep.subr.bf16.mxu0 %v1383
    %1908 = vmatpush1.bf16.msra.mxu0 %v1382
    %1909 = vmatprep.subr.bf16.mxu0 %v1389
    %1910 = vmatpush1.bf16.msra.mxu0 %v1388
    %1911 = vmatprep.subr.bf16.mxu0 %v1395
    %1912 = vmatpush1.bf16.msra.mxu0 %v1394
    %1913 = vmatprep.subr.bf16.mxu0 %v1401
    %1914 = vmatpush1.bf16.msra.mxu0 %v1400
    %1915 = vmatprep.subr.bf16.mxu0 %v1407
    %1916 = vmatpush1.bf16.msra.mxu0 %v1406
    %1917 = vmatprep.subr.bf16.mxu0 %v1413
    %1918 = vmatpush1.bf16.msra.mxu0 %v1412
    %1919 = vmatprep.subr.bf16.mxu0 %v1419
    %1920 = vmatpush1.bf16.msra.mxu0 %v1418
    %1921 = vmatprep.subr.bf16.mxu0 %v1425
    %1922 = vmatpush1.bf16.msra.mxu0 %v1424
    %1923 = vmatprep.subr.bf16.mxu0 %v1431
    %1924 = vmatpush1.bf16.msra.mxu0 %v1430
    %1925 = vmatprep.subr.bf16.mxu0 %v1437
    %1926 = vmatpush1.bf16.msra.mxu0 %v1436
    %1927 = vmatprep.subr.bf16.mxu0 %v1443
    %1928 = vmatpush1.bf16.msra.mxu0 %v1442
    %1929 = vmatprep.subr.bf16.mxu0 %v1449
    %1930 = vmatpush1.bf16.msra.mxu0 %v1448
    %1931 = vmatprep.subr.bf16.mxu0 %v1455
    %1932 = vmatpush1.bf16.msra.mxu0 %v1454
    %1933 = vmatprep.subr.bf16.mxu0 %v1461
    %1934 = vmatpush1.bf16.msra.mxu0 %v1460
    %1935 = vmatprep.mubr.bf16.mxu0 %v81
    %1936 = vmatmul.mubr.bf16.gmra.mrb[0].mxu0 %v80
    %v1937 = vpop.f32.mrb[0].mxu0
    %v1938 = vadd.f32 %v1885, %v1937
    %v1939 = vpop.f32.mrb[0].mxu0
    %v1940 = vadd.f32 %v1887, %v1939
    %v1941 = vpop.f32.mrb[0].mxu0
    %v1942 = vadd.f32 %v1889, %v1941
    %v1943 = vpop.f32.mrb[0].mxu0
    %v1944 = vadd.f32 %v1891, %v1943
    %1945 = vmatprep.mubr.bf16.mxu0 %v87
    %1946 = vmatmul.mubr.bf16.gmra.mrb[0].mxu0 %v86
    %v1947 = vpop.f32.mrb[0].mxu0
    %v1948 = vadd.f32 %v1895, %v1947
    %v1949 = vpop.f32.mrb[0].mxu0
    %v1950 = vadd.f32 %v1897, %v1949
    %v1951 = vpop.f32.mrb[0].mxu0
    %v1952 = vadd.f32 %v1899, %v1951
    %v1953 = vpop.f32.mrb[0].mxu0
    %v1954 = vadd.f32 %v1901, %v1953
    %1955 = vdwg.mxu0
    %1956 = vmatprep.subr.bf16.mxu0 %v1467
    %1957 = vmatpush1.bf16.msra.mxu0 %v1466
    %1958 = vmatprep.subr.bf16.mxu0 %v1473
    %1959 = vmatpush1.bf16.msra.mxu0 %v1472
    %1960 = vmatprep.subr.bf16.mxu0 %v1479
    %1961 = vmatpush1.bf16.msra.mxu0 %v1478
    %1962 = vmatprep.subr.bf16.mxu0 %v1485
    %1963 = vmatpush1.bf16.msra.mxu0 %v1484
    %1964 = vmatprep.subr.bf16.mxu0 %v1491
    %1965 = vmatpush1.bf16.msra.mxu0 %v1490
    %1966 = vmatprep.subr.bf16.mxu0 %v1497
    %1967 = vmatpush1.bf16.msra.mxu0 %v1496
    %1968 = vmatprep.subr.bf16.mxu0 %v1503
    %1969 = vmatpush1.bf16.msra.mxu0 %v1502
    %1970 = vmatprep.subr.bf16.mxu0 %v1509
    %1971 = vmatpush1.bf16.msra.mxu0 %v1508
    %1972 = vmatprep.subr.bf16.mxu0 %v1515
    %1973 = vmatpush1.bf16.msra.mxu0 %v1514
    %1974 = vmatprep.subr.bf16.mxu0 %v1521
    %1975 = vmatpush1.bf16.msra.mxu0 %v1520
    %1976 = vmatprep.subr.bf16.mxu0 %v1527
    %1977 = vmatpush1.bf16.msra.mxu0 %v1526
    %1978 = vmatprep.subr.bf16.mxu0 %v1533
    %1979 = vmatpush1.bf16.msra.mxu0 %v1532
    %1980 = vmatprep.subr.bf16.mxu0 %v1539
    %1981 = vmatpush1.bf16.msra.mxu0 %v1538
    %1982 = vmatprep.subr.bf16.mxu0 %v1545
    %1983 = vmatpush1.bf16.msra.mxu0 %v1544
    %1984 = vmatprep.subr.bf16.mxu0 %v1551
    %1985 = vmatpush1.bf16.msra.mxu0 %v1550
    %1986 = vmatprep.subr.bf16.mxu0 %v1557
    %1987 = vmatpush1.bf16.msra.mxu0 %v1556
    %1988 = vmatprep.mubr.bf16.mxu0 %v83
    %1989 = vmatmul.mubr.bf16.gmra.mrb[0].mxu0 %v82
    %v1990 = vpop.f32.mrb[0].mxu0
    %v1991 = vadd.f32 %v1938, %v1990
    %v1992 = vpop.f32.mrb[0].mxu0
    %v1993 = vadd.f32 %v1940, %v1992
    %v1994 = vpop.f32.mrb[0].mxu0
    %v1995 = vadd.f32 %v1942, %v1994
    %v1996 = vpop.f32.mrb[0].mxu0
    %v1997 = vadd.f32 %v1944, %v1996
    %1998 = vmatprep.mubr.bf16.mxu0 %v89
    %1999 = vmatmul.mubr.bf16.gmra.mrb[0].mxu0 %v88
    %v2000 = vpop.f32.mrb[0].mxu0
    %v2001 = vadd.f32 %v1948, %v2000
    %v2002 = vpop.f32.mrb[0].mxu0
    %v2003 = vadd.f32 %v1950, %v2002
    %v2004 = vpop.f32.mrb[0].mxu0
    %v2005 = vadd.f32 %v1952, %v2004
    %v2006 = vpop.f32.mrb[0].mxu0
    %v2007 = vadd.f32 %v1954, %v2006
    %2008 = vdwg.mxu0
    %2009 = vmatprep.subr.bf16.mxu0 %v1277
    %2010 = vmatpush1.bf16.msra.mxu0 %v1276
    %2011 = vmatprep.subr.bf16.mxu0 %v1283
    %2012 = vmatpush1.bf16.msra.mxu0 %v1282
    %2013 = vmatprep.subr.bf16.mxu0 %v1289
    %2014 = vmatpush1.bf16.msra.mxu0 %v1288
    %2015 = vmatprep.subr.bf16.mxu0 %v1295
    %2016 = vmatpush1.bf16.msra.mxu0 %v1294
    %2017 = vmatprep.subr.bf16.mxu0 %v1301
    %2018 = vmatpush1.bf16.msra.mxu0 %v1300
    %2019 = vmatprep.subr.bf16.mxu0 %v1307
    %2020 = vmatpush1.bf16.msra.mxu0 %v1306
    %2021 = vmatprep.subr.bf16.mxu0 %v1313
    %2022 = vmatpush1.bf16.msra.mxu0 %v1312
    %2023 = vmatprep.subr.bf16.mxu0 %v1319
    %2024 = vmatpush1.bf16.msra.mxu0 %v1318
    %2025 = vmatprep.subr.bf16.mxu0 %v1325
    %2026 = vmatpush1.bf16.msra.mxu0 %v1324
    %2027 = vmatprep.subr.bf16.mxu0 %v1331
    %2028 = vmatpush1.bf16.msra.mxu0 %v1330
    %2029 = vmatprep.subr.bf16.mxu0 %v1337
    %2030 = vmatpush1.bf16.msra.mxu0 %v1336
    %2031 = vmatprep.subr.bf16.mxu0 %v1343
    %2032 = vmatpush1.bf16.msra.mxu0 %v1342
    %2033 = vmatprep.subr.bf16.mxu0 %v1349
    %2034 = vmatpush1.bf16.msra.mxu0 %v1348
    %2035 = vmatprep.subr.bf16.mxu0 %v1355
    %2036 = vmatpush1.bf16.msra.mxu0 %v1354
    %2037 = vmatprep.subr.bf16.mxu0 %v1361
    %2038 = vmatpush1.bf16.msra.mxu0 %v1360
    %2039 = vmatprep.subr.bf16.mxu0 %v1367
    %2040 = vmatpush1.bf16.msra.mxu0 %v1366
    %2041 = vmatprep.mubr.bf16.mxu0 %v79
    %2042 = vmatmul.mubr.bf16.gmra.mrb[0].mxu0 %v78
    %v2043 = vpop.f32.mrb[0].mxu0
    %v2044 = vadd.f32 %v391, %v2043
    %v2045 = vpop.f32.mrb[0].mxu0
    %v2046 = vadd.f32 %v395, %v2045
    %v2047 = vpop.f32.mrb[0].mxu0
    %v2048 = vadd.f32 %v391, %v2047
    %v2049 = vpop.f32.mrb[0].mxu0
    %v2050 = vadd.f32 %v395, %v2049
    %2051 = vmatprep.mubr.bf16.mxu0 %v85
    %2052 = vmatmul.mubr.bf16.gmra.mrb[0].mxu0 %v84
    %v2053 = vpop.f32.mrb[0].mxu0
    %v2054 = vadd.f32 %v391, %v2053
    %v2055 = vpop.f32.mrb[0].mxu0
    %v2056 = vadd.f32 %v395, %v2055
    %v2057 = vpop.f32.mrb[0].mxu0
    %v2058 = vadd.f32 %v391, %v2057
    %v2059 = vpop.f32.mrb[0].mxu0
    %v2060 = vadd.f32 %v395, %v2059
    %2061 = vdwg.mxu0
    %2062 = vmatprep.subr.bf16.mxu0 %v1373
    %2063 = vmatpush1.bf16.msra.mxu0 %v1372
    %2064 = vmatprep.subr.bf16.mxu0 %v1379
    %2065 = vmatpush1.bf16.msra.mxu0 %v1378
    %2066 = vmatprep.subr.bf16.mxu0 %v1385
    %2067 = vmatpush1.bf16.msra.mxu0 %v1384
    %2068 = vmatprep.subr.bf16.mxu0 %v1391
    %2069 = vmatpush1.bf16.msra.mxu0 %v1390
    %2070 = vmatprep.subr.bf16.mxu0 %v1397
    %2071 = vmatpush1.bf16.msra.mxu0 %v1396
    %2072 = vmatprep.subr.bf16.mxu0 %v1403
    %2073 = vmatpush1.bf16.msra.mxu0 %v1402
    %2074 = vmatprep.subr.bf16.mxu0 %v1409
    %2075 = vmatpush1.bf16.msra.mxu0 %v1408
    %2076 = vmatprep.subr.bf16.mxu0 %v1415
    %2077 = vmatpush1.bf16.msra.mxu0 %v1414
    %2078 = vmatprep.subr.bf16.mxu0 %v1421
    %2079 = vmatpush1.bf16.msra.mxu0 %v1420
    %2080 = vmatprep.subr.bf16.mxu0 %v1427
    %2081 = vmatpush1.bf16.msra.mxu0 %v1426
    %2082 = vmatprep.subr.bf16.mxu0 %v1433
    %2083 = vmatpush1.bf16.msra.mxu0 %v1432
    %2084 = vmatprep.subr.bf16.mxu0 %v1439
    %2085 = vmatpush1.bf16.msra.mxu0 %v1438
    %2086 = vmatprep.subr.bf16.mxu0 %v1445
    %2087 = vmatpush1.bf16.msra.mxu0 %v1444
    %2088 = vmatprep.subr.bf16.mxu0 %v1451
    %2089 = vmatpush1.bf16.msra.mxu0 %v1450
    %2090 = vmatprep.subr.bf16.mxu0 %v1457
    %2091 = vmatpush1.bf16.msra.mxu0 %v1456
    %2092 = vmatprep.subr.bf16.mxu0 %v1463
    %2093 = vmatpush1.bf16.msra.mxu0 %v1462
    %2094 = vmatprep.mubr.bf16.mxu0 %v81
    %2095 = vmatmul.mubr.bf16.gmra.mrb[0].mxu0 %v80
    %v2096 = vpop.f32.mrb[0].mxu0
    %v2097 = vadd.f32 %v2044, %v2096
    %v2098 = vpop.f32.mrb[0].mxu0
    %v2099 = vadd.f32 %v2046, %v2098
    %v2100 = vpop.f32.mrb[0].mxu0
    %v2101 = vadd.f32 %v2048, %v2100
    %v2102 = vpop.f32.mrb[0].mxu0
    %v2103 = vadd.f32 %v2050, %v2102
    %2104 = vmatprep.mubr.bf16.mxu0 %v87
    %2105 = vmatmul.mubr.bf16.gmra.mrb[0].mxu0 %v86
    %v2106 = vpop.f32.mrb[0].mxu0
    %v2107 = vadd.f32 %v2054, %v2106
    %v2108 = vpop.f32.mrb[0].mxu0
    %v2109 = vadd.f32 %v2056, %v2108
    %v2110 = vpop.f32.mrb[0].mxu0
    %v2111 = vadd.f32 %v2058, %v2110
    %v2112 = vpop.f32.mrb[0].mxu0
    %v2113 = vadd.f32 %v2060, %v2112
    %2114 = vdwg.mxu0
    %2115 = vmatprep.subr.bf16.mxu0 %v1469
    %2116 = vmatpush1.bf16.msra.mxu0 %v1468
    %2117 = vmatprep.subr.bf16.mxu0 %v1475
    %2118 = vmatpush1.bf16.msra.mxu0 %v1474
    %2119 = vmatprep.subr.bf16.mxu0 %v1481
    %2120 = vmatpush1.bf16.msra.mxu0 %v1480
    %2121 = vmatprep.subr.bf16.mxu0 %v1487
    %2122 = vmatpush1.bf16.msra.mxu0 %v1486
    %2123 = vmatprep.subr.bf16.mxu0 %v1493
    %2124 = vmatpush1.bf16.msra.mxu0 %v1492
    %2125 = vmatprep.subr.bf16.mxu0 %v1499
    %2126 = vmatpush1.bf16.msra.mxu0 %v1498
    %2127 = vmatprep.subr.bf16.mxu0 %v1505
    %2128 = vmatpush1.bf16.msra.mxu0 %v1504
    %2129 = vmatprep.subr.bf16.mxu0 %v1511
    %2130 = vmatpush1.bf16.msra.mxu0 %v1510
    %2131 = vmatprep.subr.bf16.mxu0 %v1517
    %2132 = vmatpush1.bf16.msra.mxu0 %v1516
    %2133 = vmatprep.subr.bf16.mxu0 %v1523
    %2134 = vmatpush1.bf16.msra.mxu0 %v1522
    %2135 = vmatprep.subr.bf16.mxu0 %v1529
    %2136 = vmatpush1.bf16.msra.mxu0 %v1528
    %2137 = vmatprep.subr.bf16.mxu0 %v1535
    %2138 = vmatpush1.bf16.msra.mxu0 %v1534
    %2139 = vmatprep.subr.bf16.mxu0 %v1541
    %2140 = vmatpush1.bf16.msra.mxu0 %v1540
    %2141 = vmatprep.subr.bf16.mxu0 %v1547
    %2142 = vmatpush1.bf16.msra.mxu0 %v1546
    %2143 = vmatprep.subr.bf16.mxu0 %v1553
    %2144 = vmatpush1.bf16.msra.mxu0 %v1552
    %2145 = vmatprep.subr.bf16.mxu0 %v1559
    %2146 = vmatpush1.bf16.msra.mxu0 %v1558
    %2147 = vmatprep.mubr.bf16.mxu0 %v83
    %2148 = vmatmul.mubr.bf16.gmra.mrb[0].mxu0 %v82
    %v2149 = vpop.f32.mrb[0].mxu0
    %v2150 = vadd.f32 %v2097, %v2149
    %v2151 = vpop.f32.mrb[0].mxu0
    %v2152 = vadd.f32 %v2099, %v2151
    %v2153 = vpop.f32.mrb[0].mxu0
    %v2154 = vadd.f32 %v2101, %v2153
    %v2155 = vpop.f32.mrb[0].mxu0
    %v2156 = vadd.f32 %v2103, %v2155
    %2157 = vmatprep.mubr.bf16.mxu0 %v89
    %2158 = vmatmul.mubr.bf16.gmra.mrb[0].mxu0 %v88
    %v2159 = vpop.f32.mrb[0].mxu0
    %v2160 = vadd.f32 %v2107, %v2159
    %v2161 = vpop.f32.mrb[0].mxu0
    %v2162 = vadd.f32 %v2109, %v2161
    %v2163 = vpop.f32.mrb[0].mxu0
    %v2164 = vadd.f32 %v2111, %v2163
    %v2165 = vpop.f32.mrb[0].mxu0
    %v2166 = vadd.f32 %v2113, %v2165
    %2167 = vdwg.mxu0
    %2168 = vmatprep.subr.bf16.mxu0 %v1279
    %2169 = vmatpush1.bf16.msra.mxu0 %v1278
    %2170 = vmatprep.subr.bf16.mxu0 %v1285
    %2171 = vmatpush1.bf16.msra.mxu0 %v1284
    %2172 = vmatprep.subr.bf16.mxu0 %v1291
    %2173 = vmatpush1.bf16.msra.mxu0 %v1290
    %2174 = vmatprep.subr.bf16.mxu0 %v1297
    %2175 = vmatpush1.bf16.msra.mxu0 %v1296
    %2176 = vmatprep.subr.bf16.mxu0 %v1303
    %2177 = vmatpush1.bf16.msra.mxu0 %v1302
    %2178 = vmatprep.subr.bf16.mxu0 %v1309
    %2179 = vmatpush1.bf16.msra.mxu0 %v1308
    %2180 = vmatprep.subr.bf16.mxu0 %v1315
    %2181 = vmatpush1.bf16.msra.mxu0 %v1314
    %2182 = vmatprep.subr.bf16.mxu0 %v1321
    %2183 = vmatpush1.bf16.msra.mxu0 %v1320
    %2184 = vmatprep.subr.bf16.mxu0 %v1327
    %2185 = vmatpush1.bf16.msra.mxu0 %v1326
    %2186 = vmatprep.subr.bf16.mxu0 %v1333
    %2187 = vmatpush1.bf16.msra.mxu0 %v1332
    %2188 = vmatprep.subr.bf16.mxu0 %v1339
    %2189 = vmatpush1.bf16.msra.mxu0 %v1338
    %2190 = vmatprep.subr.bf16.mxu0 %v1345
    %2191 = vmatpush1.bf16.msra.mxu0 %v1344
    %2192 = vmatprep.subr.bf16.mxu0 %v1351
    %2193 = vmatpush1.bf16.msra.mxu0 %v1350
    %2194 = vmatprep.subr.bf16.mxu0 %v1357
    %2195 = vmatpush1.bf16.msra.mxu0 %v1356
    %2196 = vmatprep.subr.bf16.mxu0 %v1363
    %2197 = vmatpush1.bf16.msra.mxu0 %v1362
    %2198 = vmatprep.subr.bf16.mxu0 %v1369
    %2199 = vmatpush1.bf16.msra.mxu0 %v1368
    %2200 = vmatprep.mubr.bf16.mxu0 %v79
    %2201 = vmatmul.mubr.bf16.gmra.mrb[0].mxu0 %v78
    %v2202 = vpop.f32.mrb[0].mxu0
    %v2203 = vadd.f32 %v399, %v2202
    %v2204 = vpop.f32.mrb[0].mxu0
    %v2205 = vadd.f32 %v403, %v2204
    %v2206 = vpop.f32.mrb[0].mxu0
    %v2207 = vadd.f32 %v399, %v2206
    %v2208 = vpop.f32.mrb[0].mxu0
    %v2209 = vadd.f32 %v403, %v2208
    %2210 = vmatprep.mubr.bf16.mxu0 %v85
    %2211 = vmatmul.mubr.bf16.gmra.mrb[0].mxu0 %v84
    %v2212 = vpop.f32.mrb[0].mxu0
    %v2213 = vadd.f32 %v399, %v2212
    %v2214 = vpop.f32.mrb[0].mxu0
    %v2215 = vadd.f32 %v403, %v2214
    %v2216 = vpop.f32.mrb[0].mxu0
    %v2217 = vadd.f32 %v399, %v2216
    %v2218 = vpop.f32.mrb[0].mxu0
    %v2219 = vadd.f32 %v403, %v2218
    %2220 = vdwg.mxu0
    %2221 = vmatprep.subr.bf16.mxu0 %v1375
    %2222 = vmatpush1.bf16.msra.mxu0 %v1374
    %2223 = vmatprep.subr.bf16.mxu0 %v1381
    %2224 = vmatpush1.bf16.msra.mxu0 %v1380
    %2225 = vmatprep.subr.bf16.mxu0 %v1387
    %2226 = vmatpush1.bf16.msra.mxu0 %v1386
    %2227 = vmatprep.subr.bf16.mxu0 %v1393
    %2228 = vmatpush1.bf16.msra.mxu0 %v1392
    %2229 = vmatprep.subr.bf16.mxu0 %v1399
    %2230 = vmatpush1.bf16.msra.mxu0 %v1398
    %2231 = vmatprep.subr.bf16.mxu0 %v1405
    %2232 = vmatpush1.bf16.msra.mxu0 %v1404
    %2233 = vmatprep.subr.bf16.mxu0 %v1411
    %2234 = vmatpush1.bf16.msra.mxu0 %v1410
    %2235 = vmatprep.subr.bf16.mxu0 %v1417
    %2236 = vmatpush1.bf16.msra.mxu0 %v1416
    %2237 = vmatprep.subr.bf16.mxu0 %v1423
    %2238 = vmatpush1.bf16.msra.mxu0 %v1422
    %2239 = vmatprep.subr.bf16.mxu0 %v1429
    %2240 = vmatpush1.bf16.msra.mxu0 %v1428
    %2241 = vmatprep.subr.bf16.mxu0 %v1435
    %2242 = vmatpush1.bf16.msra.mxu0 %v1434
    %2243 = vmatprep.subr.bf16.mxu0 %v1441
    %2244 = vmatpush1.bf16.msra.mxu0 %v1440
    %2245 = vmatprep.subr.bf16.mxu0 %v1447
    %2246 = vmatpush1.bf16.msra.mxu0 %v1446
    %2247 = vmatprep.subr.bf16.mxu0 %v1453
    %2248 = vmatpush1.bf16.msra.mxu0 %v1452
    %2249 = vmatprep.subr.bf16.mxu0 %v1459
    %2250 = vmatpush1.bf16.msra.mxu0 %v1458
    %2251 = vmatprep.subr.bf16.mxu0 %v1465
    %2252 = vmatpush1.bf16.msra.mxu0 %v1464
    %2253 = vmatprep.mubr.bf16.mxu0 %v81
    %2254 = vmatmul.mubr.bf16.gmra.mrb[0].mxu0 %v80
    %v2255 = vpop.f32.mrb[0].mxu0
    %v2256 = vadd.f32 %v2203, %v2255
    %v2257 = vpop.f32.mrb[0].mxu0
    %v2258 = vadd.f32 %v2205, %v2257
    %v2259 = vpop.f32.mrb[0].mxu0
    %v2260 = vadd.f32 %v2207, %v2259
    %v2261 = vpop.f32.mrb[0].mxu0
    %v2262 = vadd.f32 %v2209, %v2261
    %2263 = vmatprep.mubr.bf16.mxu0 %v87
    %2264 = vmatmul.mubr.bf16.gmra.mrb[0].mxu0 %v86
    %v2265 = vpop.f32.mrb[0].mxu0
    %v2266 = vadd.f32 %v2213, %v2265
    %v2267 = vpop.f32.mrb[0].mxu0
    %v2268 = vadd.f32 %v2215, %v2267
    %v2269 = vpop.f32.mrb[0].mxu0
    %v2270 = vadd.f32 %v2217, %v2269
    %v2271 = vpop.f32.mrb[0].mxu0
    %v2272 = vadd.f32 %v2219, %v2271
    %2273 = vdwg.mxu0
    %2274 = vmatprep.subr.bf16.mxu0 %v1471
    %2275 = vmatpush1.bf16.msra.mxu0 %v1470
    %2276 = vmatprep.subr.bf16.mxu0 %v1477
    %2277 = vmatpush1.bf16.msra.mxu0 %v1476
    %2278 = vmatprep.subr.bf16.mxu0 %v1483
    %2279 = vmatpush1.bf16.msra.mxu0 %v1482
    %2280 = vmatprep.subr.bf16.mxu0 %v1489
    %2281 = vmatpush1.bf16.msra.mxu0 %v1488
    %2282 = vmatprep.subr.bf16.mxu0 %v1495
    %2283 = vmatpush1.bf16.msra.mxu0 %v1494
    %2284 = vmatprep.subr.bf16.mxu0 %v1501
    %2285 = vmatpush1.bf16.msra.mxu0 %v1500
    %2286 = vmatprep.subr.bf16.mxu0 %v1507
    %2287 = vmatpush1.bf16.msra.mxu0 %v1506
    %2288 = vmatprep.subr.bf16.mxu0 %v1513
    %2289 = vmatpush1.bf16.msra.mxu0 %v1512
    %2290 = vmatprep.subr.bf16.mxu0 %v1519
    %2291 = vmatpush1.bf16.msra.mxu0 %v1518
    %2292 = vmatprep.subr.bf16.mxu0 %v1525
    %2293 = vmatpush1.bf16.msra.mxu0 %v1524
    %2294 = vmatprep.subr.bf16.mxu0 %v1531
    %2295 = vmatpush1.bf16.msra.mxu0 %v1530
    %2296 = vmatprep.subr.bf16.mxu0 %v1537
    %2297 = vmatpush1.bf16.msra.mxu0 %v1536
    %2298 = vmatprep.subr.bf16.mxu0 %v1543
    %2299 = vmatpush1.bf16.msra.mxu0 %v1542
    %2300 = vmatprep.subr.bf16.mxu0 %v1549
    %2301 = vmatpush1.bf16.msra.mxu0 %v1548
    %2302 = vmatprep.subr.bf16.mxu0 %v1555
    %2303 = vmatpush1.bf16.msra.mxu0 %v1554
    %2304 = vmatprep.subr.bf16.mxu0 %v1561
    %2305 = vmatpush1.bf16.msra.mxu0 %v1560
    %2306 = vmatprep.mubr.bf16.mxu0 %v83
    %2307 = vmatmul.mubr.bf16.gmra.mrb[0].mxu0 %v82
    %v2308 = vpop.f32.mrb[0].mxu0
    %v2309 = vadd.f32 %v2256, %v2308
    %v2310 = vpop.f32.mrb[0].mxu0
    %v2311 = vadd.f32 %v2258, %v2310
    %v2312 = vpop.f32.mrb[0].mxu0
    %v2313 = vadd.f32 %v2260, %v2312
    %v2314 = vpop.f32.mrb[0].mxu0
    %v2315 = vadd.f32 %v2262, %v2314
    %2316 = vmatprep.mubr.bf16.mxu0 %v89
    %2317 = vmatmul.mubr.bf16.gmra.mrb[0].mxu0 %v88
    %v2318 = vpop.f32.mrb[0].mxu0
    %v2319 = vadd.f32 %v2266, %v2318
    %v2320 = vpop.f32.mrb[0].mxu0
    %v2321 = vadd.f32 %v2268, %v2320
    %v2322 = vpop.f32.mrb[0].mxu0
    %v2323 = vadd.f32 %v2270, %v2322
    %v2324 = vpop.f32.mrb[0].mxu0
    %v2325 = vadd.f32 %v2272, %v2324
    %2326 = vdwg.mxu0
    %2327 = vst [vmem:[#allocation8] sm:$0xff] %v1991
    %2328 = vst [vmem:[#allocation8 + $0x8] sm:$0xff] %v1993
    %2329 = vst [vmem:[#allocation8 + $0x10] sm:$0xff] %v2150
    %2330 = vst [vmem:[#allocation8 + $0x18] sm:$0xff] %v2152
    %2331 = vst [vmem:[#allocation8 + $0x20] sm:$0xff] %v2309
    %2332 = vst [vmem:[#allocation8 + $0x28] sm:$0xff] %v2311
    %2333 = vst [vmem:[#allocation8 + $0x30] sm:$0xff] %v1995
    %2334 = vst [vmem:[#allocation8 + $0x38] sm:$0xff] %v1997
    %2335 = vst [vmem:[#allocation8 + $0x40] sm:$0xff] %v2154
    %2336 = vst [vmem:[#allocation8 + $0x48] sm:$0xff] %v2156
    %2337 = vst [vmem:[#allocation8 + $0x50] sm:$0xff] %v2313
    %2338 = vst [vmem:[#allocation8 + $0x58] sm:$0xff] %v2315
    %2339 = vst [vmem:[#allocation8 + $0x60] sm:$0xff] %v2001
    %2340 = vst [vmem:[#allocation8 + $0x68] sm:$0xff] %v2003
    %2341 = vst [vmem:[#allocation8 + $0x70] sm:$0xff] %v2160
    %2342 = vst [vmem:[#allocation8 + $0x78] sm:$0xff] %v2162
    %2343 = vst [vmem:[#allocation8 + $0x80] sm:$0xff] %v2319
    %2344 = vst [vmem:[#allocation8 + $0x88] sm:$0xff] %v2321
    %2345 = vst [vmem:[#allocation8 + $0x90] sm:$0xff] %v2005
    %2346 = vst [vmem:[#allocation8 + $0x98] sm:$0xff] %v2007
    %2347 = vst [vmem:[#allocation8 + $0xa0] sm:$0xff] %v2164
    %2348 = vst [vmem:[#allocation8 + $0xa8] sm:$0xff] %v2166
    %2349 = vst [vmem:[#allocation8 + $0xb0] sm:$0xff] %v2323
    %2350 = vst [vmem:[#allocation8 + $0xb8] sm:$0xff] %v2325
    // Predicated region
    $region26: #{tpu_custom_call.1} parent=1 // pred_check
      _
    $region27: #{tpu_custom_call.1} parent=1 // pred_check_branch
      %2352 = sbr.rel (0) target = $region29
    $region28: #{tpu_custom_call.1} parent=1 // pred_region
      %s2354 = ssub.s32 3072, 3072
      %2355 = vsyncadd [#allocation4], %s2354
      %s2356 = sshll.u32 [#allocation8], 4
      %s2357 = int_to_ptr.vmem [resolvable:$true] %s2356
      %2362 = dma.vmem_to_hbm [thread:$0]  %s2357, 3072, %s3, [#allocation4], 768, 768, 48
    $region29: #{tpu_custom_call.1} parent=1 // pred_fallthru
      _
    // Predicated region
    $region30: #{tpu_custom_call.1} parent=1 // pred_check
      _
    $region31: #{tpu_custom_call.1} parent=1 // pred_check_branch
      %2364 = sbr.rel (0) target = $region33
    $region32: #{tpu_custom_call.1} parent=1 // pred_region
      %2365 = dma.done [#allocation4], 3072
    $region33: #{tpu_custom_call.1} parent=1 // pred_fallthru
      _
    %2366 = vsyncpa [#allocation3], 1
    %2367 = vsyncpa [#allocation6], 1
    %2368 = vsyncpa [#allocation4], 1

</llo_original>
